<compile_context>
chip_gen: v6e
topology: v6e:2x2x1
jax: 0.10.0
libtpu: 0.0.40
codegen_flags: <defaults>
</compile_context>

<pallas_src>
import jax
import jax.numpy as jnp
import numpy as np
from jax.experimental import pallas as pl
from jax.experimental.pallas import tpu as pltpu


def make_graph_kernel(N, C):
    NM1 = N - 1
    NC = N * C
    NGC = N * NM1 * C
    neigh_lists = [[j for j in range(N) if j != i] for i in range(N)]

    def kernel(x_ref, w1_ref, wx_ref, wnh_ref, bzr_ref, bn_ref, gamma_ref, out_ref):
        # x_ref : (1, N*C, T) block of all node features for this (batch, HW-tile).
        gamma = gamma_ref[0]                              # SMEM scalar
        x_all = x_ref[0]                                  # (N*C, T) f32
        x_bf = x_all.astype(jnp.bfloat16)

        # Stage 1 (MXU, K=N*C): message gate pre-activations for every
        # (node, neighbor, channel) triple AND the GRU h-path [z|r] pre-acts,
        # in one matmul on x.
        s1 = jnp.dot(w1_ref[...], x_bf, preferred_element_type=jnp.float32)
        gates = jax.nn.sigmoid(s1[:NGC, :])               # (N*(N-1)*C, T)
        gh = s1[NGC:, :]                                  # (2*N*C, T)  [z-h | r-h]

        # Message aggregation  m_i = sum_g  x_{neigh_i(g)} * gate_{i,g}  (VPU).
        m_parts = []
        for i in range(N):
            acc = None
            for g, j in enumerate(neigh_lists[i]):
                r0 = (i * NM1 + g) * C
                term = x_all[j * C:(j + 1) * C, :] * gates[r0:r0 + C, :]
                acc = term if acc is None else acc + term
            m_parts.append(acc)
        m_all = jnp.concatenate(m_parts, axis=0)          # (N*C, T)

        # Stage 2 (MXU, K=N*C): x-path GRU pre-acts for all nodes, grouped by
        # gate type [z | r | n] via block-diagonal kron(I_N, W) weights.
        gx = jnp.dot(wx_ref[...], m_all.astype(jnp.bfloat16),
                     preferred_element_type=jnp.float32)  # (3*N*C, T)

        zr = jax.nn.sigmoid(gx[:2 * NC, :] + gh + bzr_ref[...])   # (2*N*C, T)
        z = zr[:NC, :]
        r = zr[NC:, :]

        # Stage 3 (MXU, K=N*C): candidate h-path (needs r).
        nh = jnp.dot(wnh_ref[...], (x_all * r).astype(jnp.bfloat16),
                     preferred_element_type=jnp.float32)  # (N*C, T)
        n = jnp.tanh(gx[2 * NC:, :] + nh + bn_ref[...])

        # pred = gamma*h_new + h,  h_new = h*(1-z) + n*z
        #      = h*(1+gamma) + gamma*z*(n - h)            (fewer VALU ops)
        pred = x_all * (1.0 + gamma) + gamma * (z * (n - x_all))
        out_ref[0] = pred.astype(out_ref.dtype)           # one contiguous lane-dense store

    return kernel


def _pack_params(N, C, params):
    """Build the fused / structural weight matrices from the raw parameters."""
    (wc, wz_x, wz_h, wr_x, wr_h, wn_x, wn_h, bz, br, bn, gamma) = params
    NM1 = N - 1
    NC = N * C

    # Pair-difference grouped-conv rows: wgt[i*(N-1)+g] = wc[g].(h_i - h_{neigh_i(g)})
    S = np.zeros((N * NM1, N, NM1), np.float32)
    for i in range(N):
        neigh = [j for j in range(N) if j != i]
        for g, j in enumerate(neigh):
            r = i * NM1 + g
            S[r, i, g] += 1.0
            S[r, j, g] -= 1.0
    w_pair = jnp.einsum('rng,gc->rnc', jnp.asarray(S), wc).reshape(N * NM1, NC)

    # Fold the repeat/view channel-selection quirk of _get_msg straight into the
    # pair weights (row selection commutes with the elementwise sigmoid):
    #   gates[(i*(N-1)+g)*C + ch] = sigmoid( w_pair[i*(N-1)+(g*C+ch)%(N-1)] . x )
    sel = np.zeros((N * NM1 * C, N * NM1), np.float32)
    ch = np.arange(C)
    for i in range(N):
        for g in range(NM1):
            rows = (i * NM1 + g) * C + ch
            cols = i * NM1 + (g * C + ch) % NM1
            sel[rows, cols] = 1.0
    gw = jnp.asarray(sel) @ w_pair                        # (N*(N-1)*C, N*C)

    # Block-diagonal kron(I_N, W^T) GRU weights (weights shared across nodes),
    # grouped by gate type so the kernel slices z/r/n with contiguous sublanes.
    eye = jnp.eye(N, dtype=jnp.float32)

    def bd(w):                                            # w stored as (C_in, C_out)
        return jnp.kron(eye, w.T)                         # (N*C_out, N*C_in)

    w1 = jnp.concatenate([gw, bd(wz_h), bd(wr_h)], axis=0).astype(jnp.bfloat16)
    wx = jnp.concatenate([bd(wz_x), bd(wr_x), bd(wn_x)], axis=0).astype(jnp.bfloat16)
    wnh = bd(wn_h).astype(jnp.bfloat16)

    bzr = jnp.concatenate([jnp.tile(bz[0], N), jnp.tile(br[0], N)])[:, None]  # (2*N*C, 1)
    bn_all = jnp.tile(bn[0], N)[:, None]                                      # (N*C, 1)
    return w1, wx, wnh, bzr, bn_all, gamma


def _pick_lane_tile(HW, max_tile=2048):
    """Largest lane tile <= max_tile; prefer a multiple of 128 dividing HW."""
    if HW <= max_tile:
        return HW
    for t in range(max_tile, 127, -128):
        if HW % t == 0:
            return t
    return max_tile  # non-dividing fallback: every op is pointwise over lanes


def graph_model_pallas(inputs, params):
    """inputs: (B, N, C, H, W) float32 -> (B, N, C, H, W)."""
    B, N, C, H, W = inputs.shape
    HW = H * W
    NC = N * C
    NGC = N * (N - 1) * C
    w1, wx, wnh, bzr, bn_all, gamma = _pack_params(N, C, params)

    # (B, N, C, H, W) -> (B, N*C, HW): pure reshape, no transpose / HBM shuffle.
    x = inputs.reshape(B, NC, HW)

    T = _pick_lane_tile(HW)
    n_t = pl.cdiv(HW, T)

    kernel = make_graph_kernel(N, C)

    def _rep(shape):  # replicated (non-tiled) weight block
        nd = len(shape)
        return pl.BlockSpec(shape, lambda b, t, _nd=nd: (0,) * _nd)

    in_specs = [
        pl.BlockSpec((1, NC, T), lambda b, t: (b, 0, t)),       # x tile
        _rep((NGC + 2 * NC, NC)),                               # [gate-fold | Wzh | Wrh]
        _rep((3 * NC, NC)),                                     # [Wzx | Wrx | Wnx] block-diag
        _rep((NC, NC)),                                         # Wnh block-diag
        _rep((2 * NC, 1)),                                      # [bz | br]
        _rep((NC, 1)),                                          # bn
        pl.BlockSpec(memory_space=pltpu.MemorySpace.SMEM),      # gamma (scalar)
    ]
    out_spec = pl.BlockSpec((1, NC, T), lambda b, t: (b, 0, t))

    # Advisory cost estimate (matmuls + message aggregation; transcendentals =
    # gate sigmoids + GRU sigmoids/tanh; bytes = f32 in/out + bf16 weights).
    flops = B * HW * 2 * ((NGC + 2 * NC) * NC + 3 * NC * NC + NC * NC + NGC)
    transc = B * HW * (NGC + 2 * NC + NC)
    bytes_acc = 2 * 4 * B * NC * HW + 2 * ((NGC + 2 * NC) * NC + 4 * NC * NC + 3 * NC)

    out = pl.pallas_call(
        kernel,
        grid=(B, n_t),
        in_specs=in_specs,
        out_specs=out_spec,
        out_shape=jax.ShapeDtypeStruct((B, NC, HW), jnp.float32),
        compiler_params=pltpu.CompilerParams(
            dimension_semantics=("parallel", "parallel"),
            vmem_limit_bytes=48 * 1024 * 1024),
        cost_estimate=pl.CostEstimate(flops=flops, transcendentals=transc,
                                      bytes_accessed=bytes_acc),
    )(x, w1, wx, wnh, bzr, bn_all, gamma)

    return out.reshape(B, N, C, H, W)


def graph_model_reference(inputs, params):
    """Pure-JAX mirror of the PyTorch forward (for validation)."""
    B, N, C, H, W = inputs.shape
    (wc, wz_x, wz_h, wr_x, wr_h, wn_x, wn_h, bz, br, bn, gamma) = params

    def chmm(a, w):  # a: (B,C,H,W), w: (C, Cout) -> (B,Cout,H,W)
        return jnp.einsum('bchw,cd->bdhw', a, w)

    preds = []
    for i in range(N):
        h_base = inputs[:, i]                               # (B, C, H, W)
        neigh = [j for j in range(N) if j != i]
        wgt_cols = []
        for g, j in enumerate(neigh):
            diff = h_base - inputs[:, j]
            wgt_cols.append(jnp.einsum('bchw,c->bhw', diff, wc[g]))
        wgt = jnp.stack(wgt_cols, axis=1)                   # (B, N-1, H, W)
        m_t = jnp.zeros((B, C, H, W), jnp.float32)
        for g, j in enumerate(neigh):
            gidx = (g * C + np.arange(C)) % (N - 1)         # repeat/view quirk
            gate = jax.nn.sigmoid(wgt[:, gidx])             # (B, C, H, W)
            m_t = m_t + inputs[:, j] * gate
        z = jax.nn.sigmoid(chmm(m_t, wz_x) + chmm(h_base, wz_h) + bz[0][:, None, None])
        r = jax.nn.sigmoid(chmm(m_t, wr_x) + chmm(h_base, wr_h) + br[0][:, None, None])
        n = jnp.tanh(chmm(m_t, wn_x) + chmm(h_base * r, wn_h) + bn[0][:, None, None])
        h_new = h_base * (1.0 - z) + n * z
        preds.append(h_new * gamma[0] + h_base)
    return jnp.stack(preds, axis=1)


def init_params(key, N, C):
    ks = jax.random.split(key, 7)
    wc = jax.random.normal(ks[0], (N - 1, C), jnp.float32) * 0.1   # Conv2d(C*(N-1), N-1, 1, groups=N-1)
    wz = jax.random.normal(ks[1], (2 * C, C), jnp.float32) * 0.1   # update gate
    wr = jax.random.normal(ks[2], (2 * C, C), jnp.float32) * 0.1   # reset gate
    wn = jax.random.normal(ks[3], (2 * C, C), jnp.float32) * 0.1   # candidate gate
    bz = jax.random.normal(ks[4], (1, C), jnp.float32) * 0.1
    br = jax.random.normal(ks[5], (1, C), jnp.float32) * 0.1
    bn = jax.random.normal(ks[6], (1, C), jnp.float32) * 0.1
    # PyTorch inits gamma to zeros(1); use a nonzero value so the GRU path
    # actually contributes to the output in this synthetic test.
    gamma = jnp.full((1,), 0.5, jnp.float32)
    return (wc, wz[:C], wz[C:], wr[:C], wr[C:], wn[:C], wn[C:], bz, br, bn, gamma)


if __name__ == "__main__":
    # H=W=16 -> HW=256: lane axis is a multiple of 128 (lane-dense stores).
    B, N, C, H, W = 2, 3, 32, 16, 16   # batch, nodes, channels (chnn), spatial
    key = jax.random.PRNGKey(0)
    k_in, k_par = jax.random.split(key)
    inputs = jax.random.normal(k_in, (B, N, C, H, W), jnp.float32)
    params = init_params(k_par, N, C)

    fwd = jax.jit(graph_model_pallas)
    out = jax.block_until_ready(fwd(inputs, params))

    ref = graph_model_reference(inputs, params)
    assert out.shape == (B, N, C, H, W)
    # bf16 MXU operands (f32 accumulation) -> relaxed tolerance vs f32 reference.
    np.testing.assert_allclose(np.asarray(out), np.asarray(ref),
                               rtol=2e-2, atol=2e-2)
    print("KERNEL_OK")
</pallas_src>

<mosaic_0001>
module attributes {stable_mosaic.version = 11 : i64} {
  func.func @kernel(%arg0: i32, %arg1: i32, %arg2: memref<1x96x256xf32, #tpu.memory_space<vmem>>, %arg3: memref<384x96xbf16, #tpu.memory_space<vmem>>, %arg4: memref<288x96xbf16, #tpu.memory_space<vmem>>, %arg5: memref<96x96xbf16, #tpu.memory_space<vmem>>, %arg6: memref<192x1xf32, #tpu.memory_space<vmem>>, %arg7: memref<96x1xf32, #tpu.memory_space<vmem>>, %arg8: memref<1xf32, #tpu.memory_space<smem>>, %arg9: memref<1x96x256xf32, #tpu.memory_space<vmem>>) attributes {dimension_semantics = [#tpu.dimension_semantics<parallel>, #tpu.dimension_semantics<parallel>], iteration_bounds = array<i64: 2, 1>, scalar_prefetch = 0 : i64, scratch_operands = 0 : i64, tpu.core_type = #tpu.core_type<tc>, window_params = [{transform_indices = @transform_0, window_bounds = array<i64: 1, 96, 256>}, {pipeline_mode = #tpu.pipeline_mode<synchronous>, transform_indices = @transform_1, window_bounds = array<i64: 384, 96>}, {pipeline_mode = #tpu.pipeline_mode<synchronous>, transform_indices = @transform_2, window_bounds = array<i64: 288, 96>}, {pipeline_mode = #tpu.pipeline_mode<synchronous>, transform_indices = @transform_3, window_bounds = array<i64: 96, 96>}, {pipeline_mode = #tpu.pipeline_mode<synchronous>, transform_indices = @transform_4, window_bounds = array<i64: 192, 1>}, {pipeline_mode = #tpu.pipeline_mode<synchronous>, transform_indices = @transform_5, window_bounds = array<i64: 96, 1>}, {transform_indices = @transform_6, window_bounds = array<i64: 1>}, {transform_indices = @transform_7, window_bounds = array<i64: 1, 96, 256>}]} {
    %c0 = arith.constant 0 : index
    %0 = memref.load %arg8[%c0] : memref<1xf32, #tpu.memory_space<smem>>
    %c0_0 = arith.constant 0 : index
    %c0_1 = arith.constant 0 : index
    %c0_2 = arith.constant 0 : index
    %1 = vector.load %arg2[%c0_0, %c0_1, %c0_2] : memref<1x96x256xf32, #tpu.memory_space<vmem>>, vector<1x96x256xf32>
    %2 = vector.shape_cast %1 : vector<1x96x256xf32> to vector<96x256xf32>
    %3 = arith.truncf %2 : vector<96x256xf32> to vector<96x256xbf16>
    %c0_3 = arith.constant 0 : index
    %c0_4 = arith.constant 0 : index
    %4 = vector.load %arg3[%c0_3, %c0_4] : memref<384x96xbf16, #tpu.memory_space<vmem>>, vector<384x96xbf16>
    %cst = arith.constant dense<0.000000e+00> : vector<384x256xf32>
    %5 = tpu.matmul %4, %3, %cst {dimension_numbers = #tpu.dot_dimension_numbers<[1], [0], [0], [1], [0, 0, 1, 1], [], []>} : vector<384x96xbf16>, vector<96x256xbf16>, vector<384x256xf32> -> vector<384x256xf32>
    %6 = vector.extract_strided_slice %5 {offsets = [0, 0], sizes = [192, 256], strides = [1, 1]} : vector<384x256xf32> to vector<192x256xf32>
    %7 = arith.negf %6 : vector<192x256xf32>
    %8 = math.exp %7 : vector<192x256xf32>
    %cst_5 = arith.constant 1.000000e+00 : f32
    %9 = vector.broadcast %cst_5 : f32 to vector<192x256xf32>
    %10 = arith.addf %9, %8 : vector<192x256xf32>
    %11 = arith.divf %9, %10 : vector<192x256xf32>
    %12 = vector.extract_strided_slice %5 {offsets = [192, 0], sizes = [192, 256], strides = [1, 1]} : vector<384x256xf32> to vector<192x256xf32>
    %13 = vector.extract_strided_slice %2 {offsets = [32, 0], sizes = [32, 256], strides = [1, 1]} : vector<96x256xf32> to vector<32x256xf32>
    %14 = vector.extract_strided_slice %11 {offsets = [0, 0], sizes = [32, 256], strides = [1, 1]} : vector<192x256xf32> to vector<32x256xf32>
    %15 = arith.mulf %13, %14 : vector<32x256xf32>
    %16 = vector.extract_strided_slice %2 {offsets = [64, 0], sizes = [32, 256], strides = [1, 1]} : vector<96x256xf32> to vector<32x256xf32>
    %17 = vector.extract_strided_slice %11 {offsets = [32, 0], sizes = [32, 256], strides = [1, 1]} : vector<192x256xf32> to vector<32x256xf32>
    %18 = arith.mulf %16, %17 : vector<32x256xf32>
    %19 = arith.addf %15, %18 : vector<32x256xf32>
    %20 = vector.extract_strided_slice %2 {offsets = [0, 0], sizes = [32, 256], strides = [1, 1]} : vector<96x256xf32> to vector<32x256xf32>
    %21 = vector.extract_strided_slice %11 {offsets = [64, 0], sizes = [32, 256], strides = [1, 1]} : vector<192x256xf32> to vector<32x256xf32>
    %22 = arith.mulf %20, %21 : vector<32x256xf32>
    %23 = vector.extract_strided_slice %2 {offsets = [64, 0], sizes = [32, 256], strides = [1, 1]} : vector<96x256xf32> to vector<32x256xf32>
    %24 = vector.extract_strided_slice %11 {offsets = [96, 0], sizes = [32, 256], strides = [1, 1]} : vector<192x256xf32> to vector<32x256xf32>
    %25 = arith.mulf %23, %24 : vector<32x256xf32>
    %26 = arith.addf %22, %25 : vector<32x256xf32>
    %27 = vector.extract_strided_slice %2 {offsets = [0, 0], sizes = [32, 256], strides = [1, 1]} : vector<96x256xf32> to vector<32x256xf32>
    %28 = vector.extract_strided_slice %11 {offsets = [128, 0], sizes = [32, 256], strides = [1, 1]} : vector<192x256xf32> to vector<32x256xf32>
    %29 = arith.mulf %27, %28 : vector<32x256xf32>
    %30 = vector.extract_strided_slice %2 {offsets = [32, 0], sizes = [32, 256], strides = [1, 1]} : vector<96x256xf32> to vector<32x256xf32>
    %31 = vector.extract_strided_slice %11 {offsets = [160, 0], sizes = [32, 256], strides = [1, 1]} : vector<192x256xf32> to vector<32x256xf32>
    %32 = arith.mulf %30, %31 : vector<32x256xf32>
    %33 = arith.addf %29, %32 : vector<32x256xf32>
    %34 = tpu.concatenate %19, %26, %33 in 0 : vector<32x256xf32>, vector<32x256xf32>, vector<32x256xf32> -> vector<96x256xf32>
    %c0_6 = arith.constant 0 : index
    %c0_7 = arith.constant 0 : index
    %35 = vector.load %arg4[%c0_6, %c0_7] : memref<288x96xbf16, #tpu.memory_space<vmem>>, vector<288x96xbf16>
    %36 = arith.truncf %34 : vector<96x256xf32> to vector<96x256xbf16>
    %cst_8 = arith.constant dense<0.000000e+00> : vector<288x256xf32>
    %37 = tpu.matmul %35, %36, %cst_8 {dimension_numbers = #tpu.dot_dimension_numbers<[1], [0], [0], [1], [0, 0, 1, 1], [], []>} : vector<288x96xbf16>, vector<96x256xbf16>, vector<288x256xf32> -> vector<288x256xf32>
    %38 = vector.extract_strided_slice %37 {offsets = [0, 0], sizes = [192, 256], strides = [1, 1]} : vector<288x256xf32> to vector<192x256xf32>
    %39 = arith.addf %38, %12 : vector<192x256xf32>
    %c0_9 = arith.constant 0 : index
    %c0_10 = arith.constant 0 : index
    %40 = vector.load %arg6[%c0_9, %c0_10] : memref<192x1xf32, #tpu.memory_space<vmem>>, vector<192x1xf32>
    %41 = vector.broadcast %40 : vector<192x1xf32> to vector<192x256xf32>
    %42 = arith.addf %39, %41 : vector<192x256xf32>
    %43 = arith.negf %42 : vector<192x256xf32>
    %44 = math.exp %43 : vector<192x256xf32>
    %cst_11 = arith.constant 1.000000e+00 : f32
    %45 = vector.broadcast %cst_11 : f32 to vector<192x256xf32>
    %46 = arith.addf %45, %44 : vector<192x256xf32>
    %47 = arith.divf %45, %46 : vector<192x256xf32>
    %48 = vector.extract_strided_slice %47 {offsets = [0, 0], sizes = [96, 256], strides = [1, 1]} : vector<192x256xf32> to vector<96x256xf32>
    %49 = vector.extract_strided_slice %47 {offsets = [96, 0], sizes = [96, 256], strides = [1, 1]} : vector<192x256xf32> to vector<96x256xf32>
    %c0_12 = arith.constant 0 : index
    %c0_13 = arith.constant 0 : index
    %50 = vector.load %arg5[%c0_12, %c0_13] : memref<96x96xbf16, #tpu.memory_space<vmem>>, vector<96x96xbf16>
    %51 = arith.mulf %2, %49 : vector<96x256xf32>
    %52 = arith.truncf %51 : vector<96x256xf32> to vector<96x256xbf16>
    %cst_14 = arith.constant dense<0.000000e+00> : vector<96x256xf32>
    %53 = tpu.matmul %50, %52, %cst_14 {dimension_numbers = #tpu.dot_dimension_numbers<[1], [0], [0], [1], [0, 0, 1, 1], [], []>} : vector<96x96xbf16>, vector<96x256xbf16>, vector<96x256xf32> -> vector<96x256xf32>
    %54 = vector.extract_strided_slice %37 {offsets = [192, 0], sizes = [96, 256], strides = [1, 1]} : vector<288x256xf32> to vector<96x256xf32>
    %55 = arith.addf %54, %53 : vector<96x256xf32>
    %c0_15 = arith.constant 0 : index
    %c0_16 = arith.constant 0 : index
    %56 = vector.load %arg7[%c0_15, %c0_16] : memref<96x1xf32, #tpu.memory_space<vmem>>, vector<96x1xf32>
    %57 = vector.broadcast %56 : vector<96x1xf32> to vector<96x256xf32>
    %58 = arith.addf %55, %57 : vector<96x256xf32>
    %59 = math.tanh %58 : vector<96x256xf32>
    %cst_17 = arith.constant 1.000000e+00 : f32
    %60 = arith.addf %cst_17, %0 : f32
    %61 = vector.broadcast %60 : f32 to vector<96x256xf32>
    %62 = arith.mulf %2, %61 : vector<96x256xf32>
    %63 = arith.subf %59, %2 : vector<96x256xf32>
    %64 = arith.mulf %48, %63 : vector<96x256xf32>
    %65 = vector.broadcast %0 : f32 to vector<96x256xf32>
    %66 = arith.mulf %65, %64 : vector<96x256xf32>
    %67 = arith.addf %62, %66 : vector<96x256xf32>
    %c0_18 = arith.constant 0 : index
    %c0_19 = arith.constant 0 : index
    %c0_20 = arith.constant 0 : index
    %68 = vector.load %arg9[%c0_18, %c0_19, %c0_20] : memref<1x96x256xf32, #tpu.memory_space<vmem>>, vector<1x96x256xf32>
    %69 = vector.shape_cast %68 : vector<1x96x256xf32> to vector<96x256xf32>
    %70 = vector.shape_cast %67 : vector<96x256xf32> to vector<1x96x256xf32>
    tpu.vector_store %arg9[%c0_18, %c0_19, %c0_20], %70 {strides = array<i32>} : memref<1x96x256xf32, #tpu.memory_space<vmem>>, vector<1x96x256xf32>,
    return
  }
  func.func @transform_0(%arg0: i32, %arg1: i32) -> (i32, i32, i32) {
    %c0_i32 = arith.constant 0 : i32
    %c0_i32_0 = arith.constant 0 : i32
    return %arg0, %c0_i32, %arg1 : i32, i32, i32
  }
  func.func @transform_1(%arg0: i32, %arg1: i32) -> (i32, i32) {
    %c0_i32 = arith.constant 0 : i32
    %c0_i32_0 = arith.constant 0 : i32
    %c0_i32_1 = arith.constant 0 : i32
    return %c0_i32, %c0_i32_0 : i32, i32
  }
  func.func @transform_2(%arg0: i32, %arg1: i32) -> (i32, i32) {
    %c0_i32 = arith.constant 0 : i32
    %c0_i32_0 = arith.constant 0 : i32
    %c0_i32_1 = arith.constant 0 : i32
    return %c0_i32, %c0_i32_0 : i32, i32
  }
  func.func @transform_3(%arg0: i32, %arg1: i32) -> (i32, i32) {
    %c0_i32 = arith.constant 0 : i32
    %c0_i32_0 = arith.constant 0 : i32
    %c0_i32_1 = arith.constant 0 : i32
    return %c0_i32, %c0_i32_0 : i32, i32
  }
  func.func @transform_4(%arg0: i32, %arg1: i32) -> (i32, i32) {
    %c0_i32 = arith.constant 0 : i32
    %c0_i32_0 = arith.constant 0 : i32
    %c0_i32_1 = arith.constant 0 : i32
    return %c0_i32, %c0_i32_0 : i32, i32
  }
  func.func @transform_5(%arg0: i32, %arg1: i32) -> (i32, i32) {
    %c0_i32 = arith.constant 0 : i32
    %c0_i32_0 = arith.constant 0 : i32
    %c0_i32_1 = arith.constant 0 : i32
    return %c0_i32, %c0_i32_0 : i32, i32
  }
  func.func @transform_6(%arg0: i32, %arg1: i32) -> i32 {
    %c0_i32 = arith.constant 0 : i32
    %c0_i32_0 = arith.constant 0 : i32
    return %c0_i32 : i32
  }
  func.func @transform_7(%arg0: i32, %arg1: i32) -> (i32, i32, i32) {
    %c0_i32 = arith.constant 0 : i32
    %c0_i32_0 = arith.constant 0 : i32
    return %arg0, %c0_i32, %arg1 : i32, i32, i32
  }
}

</mosaic_0001>

<llo_original>
// kernel: tile.14
$region0: #{tile.14}
  #allocation0 [shape = 's32[1]{0}', space=sflag, size = 0x4, scoped, tag = 'scoped memory for tile.14']
  %s0 = inlined_call_operand.vmem [shape: f32[32], index: 0, kind: input, shape index: {}]
  %s1 = inlined_call_operand.vmem [shape: f32[3,32], index: 1, kind: output, shape index: {}]
  // Predicated region
  $region2: #{tile.14} parent=0 // pred_check
    _
  $region3: #{tile.14} parent=0 // pred_check_branch
    %3 = sbr.rel (0) target = $region5
  $region4: #{tile.14} parent=0 // pred_region
    _
  $region5: #{tile.14} parent=0 // pred_fallthru
    _
  %v4 = vld [vmem:[%s0] ss:$0 sm:$0xff]
  %5 = vst [vmem:[%s1] sm:$0xf] %v4

// kernel: tile.15
$region0: #{tile.15}
  %s0 = inlined_call_operand.vmem [shape: f32[3,32], index: 0, kind: input, shape index: {}]
  %s1 = inlined_call_operand.vmem [shape: f32[96], index: 1, kind: output, shape index: {}]
  $region1: #{tile.15} parent=0
    #allocation0 [shape = 'u8[4096]{0}', space=vmem, size = 0x1000, scoped, tag = 'scoped mem for output reshape']
    #allocation1 [shape = 'u8[4096]{0}', space=vmem, size = 0x1000, scoped, tag = 'scoped mem for input reshape']
    %s3 = sshll.u32 1, 4
    %s4 = ssub.s32 %s3, 1
    %v5 = vld [vmem:[%s0] sm:%s4]
    %6 = vst [vmem:[#allocation1] sm:%s4] %v5
    %v7 = vld [vmem:[#allocation1] sm:$0x1]
    %vm8 = vcmask 261120
    %9 = vst.msk [vmem:[#allocation0] sm:$0x1] %vm8, %v7
    %s10 = scalar_lea.vmem [#allocation1], 2
    %v11 = vld [vmem:[%s10] sm:$0x1]
    %12 = vrot.lane.b32.xlu0 %v11, 64
    %v13 = vpop.permute.xlu0 %12
    %vm14 = vcmask 785920
    %15 = vst.msk [vmem:[#allocation0] sm:$0x1] %vm14, %v13
    %s16 = scalar_lea.vmem [#allocation1], 1
    %v17 = vld [vmem:[%s16] sm:$0x1]
    %18 = vrot.lane.b32.xlu0 %v17, 32
    %v19 = vpop.permute.xlu0 %18
    %vm20 = vcmask 523520
    %21 = vst.msk [vmem:[#allocation0] sm:$0x1] %vm20, %v19
    %s23 = sshll.u32 1, 1
    %s24 = ssub.s32 %s23, 1
    %v26 = vld [vmem:[#allocation0] sm:%s24]
    %s27 = sshll.u32 1, 1
    %s28 = ssub.s32 %s27, 1
    %29 = vst [vmem:[%s1] sm:%s28] %v26

// kernel: tile.0
$region0: #{tile.0}
  %s0 = inlined_call_operand.vmem [shape: f32[3,32], index: 0, kind: input, shape index: {}]
  %s1 = inlined_call_operand.vmem [shape: f32[96,1], index: 1, kind: output, shape index: {}]
  $region1: #{tile.0} parent=0
    #allocation0 [shape = 'u8[4096]{0}', space=vmem, size = 0x1000, scoped, tag = 'scoped mem for input reshape']
    %s3 = sshll.u32 1, 4
    %s4 = ssub.s32 %s3, 1
    %v5 = vld [vmem:[%s0] sm:%s4]
    %6 = vst [vmem:[#allocation0] sm:%s4] %v5
    %v7 = vld [vmem:[#allocation0] sm:$0x7]
    %vm8 = vcmask 7168
    %9 = vst.msk [vmem:[%s1] sm:$0x1] %vm8, %v7
    %s10 = scalar_lea.vmem %s1, 31
    %11 = vst.msk [vmem:[%s10] sm:$0x2] %vm8, %v7
    %s12 = scalar_lea.vmem %s1, 62
    %13 = vst.msk [vmem:[%s12] sm:$0x4] %vm8, %v7
    %v14 = vld [vmem:[#allocation0] sm:$0x7]
    %15 = vrot.lane.b32.xlu0 %v14, 127
    %v16 = vpop.permute.xlu0 %15
    %vm17 = vcmask 7168
    %s18 = scalar_lea.vmem %s1, 1
    %19 = vst.msk [vmem:[%s18] sm:$0x1] %vm17, %v16
    %s20 = scalar_lea.vmem %s1, 32
    %21 = vst.msk [vmem:[%s20] sm:$0x2] %vm17, %v16
    %s22 = scalar_lea.vmem %s1, 63
    %23 = vst.msk [vmem:[%s22] sm:$0x4] %vm17, %v16
    %v24 = vld [vmem:[#allocation0] sm:$0x7]
    %25 = vrot.lane.b32.xlu0 %v24, 126
    %v26 = vpop.permute.xlu0 %25
    %vm27 = vcmask 7168
    %s28 = scalar_lea.vmem %s1, 2
    %29 = vst.msk [vmem:[%s28] sm:$0x1] %vm27, %v26
    %s30 = scalar_lea.vmem %s1, 33
    %31 = vst.msk [vmem:[%s30] sm:$0x2] %vm27, %v26
    %s32 = scalar_lea.vmem %s1, 64
    %33 = vst.msk [vmem:[%s32] sm:$0x4] %vm27, %v26
    %v34 = vld [vmem:[#allocation0] sm:$0x7]
    %35 = vrot.lane.b32.xlu0 %v34, 125
    %v36 = vpop.permute.xlu0 %35
    %vm37 = vcmask 7168
    %s38 = scalar_lea.vmem %s1, 3
    %39 = vst.msk [vmem:[%s38] sm:$0x1] %vm37, %v36
    %s40 = scalar_lea.vmem %s1, 34
    %41 = vst.msk [vmem:[%s40] sm:$0x2] %vm37, %v36
    %s42 = scalar_lea.vmem %s1, 65
    %43 = vst.msk [vmem:[%s42] sm:$0x4] %vm37, %v36
    %v44 = vld [vmem:[#allocation0] sm:$0x7]
    %45 = vrot.lane.b32.xlu0 %v44, 124
    %v46 = vpop.permute.xlu0 %45
    %vm47 = vcmask 7168
    %s48 = scalar_lea.vmem %s1, 4
    %49 = vst.msk [vmem:[%s48] sm:$0x1] %vm47, %v46
    %s50 = scalar_lea.vmem %s1, 35
    %51 = vst.msk [vmem:[%s50] sm:$0x2] %vm47, %v46
    %s52 = scalar_lea.vmem %s1, 66
    %53 = vst.msk [vmem:[%s52] sm:$0x4] %vm47, %v46
    %v54 = vld [vmem:[#allocation0] sm:$0x7]
    %55 = vrot.lane.b32.xlu0 %v54, 123
    %v56 = vpop.permute.xlu0 %55
    %vm57 = vcmask 7168
    %s58 = scalar_lea.vmem %s1, 5
    %59 = vst.msk [vmem:[%s58] sm:$0x1] %vm57, %v56
    %s60 = scalar_lea.vmem %s1, 36
    %61 = vst.msk [vmem:[%s60] sm:$0x2] %vm57, %v56
    %s62 = scalar_lea.vmem %s1, 67
    %63 = vst.msk [vmem:[%s62] sm:$0x4] %vm57, %v56
    %v64 = vld [vmem:[#allocation0] sm:$0x7]
    %65 = vrot.lane.b32.xlu0 %v64, 122
    %v66 = vpop.permute.xlu0 %65
    %vm67 = vcmask 7168
    %s68 = scalar_lea.vmem %s1, 6
    %69 = vst.msk [vmem:[%s68] sm:$0x1] %vm67, %v66
    %s70 = scalar_lea.vmem %s1, 37
    %71 = vst.msk [vmem:[%s70] sm:$0x2] %vm67, %v66
    %s72 = scalar_lea.vmem %s1, 68
    %73 = vst.msk [vmem:[%s72] sm:$0x4] %vm67, %v66
    %v74 = vld [vmem:[#allocation0] sm:$0x7]
    %75 = vrot.lane.b32.xlu0 %v74, 121
    %v76 = vpop.permute.xlu0 %75
    %vm77 = vcmask 7168
    %s78 = scalar_lea.vmem %s1, 7
    %79 = vst.msk [vmem:[%s78] sm:$0x1] %vm77, %v76
    %s80 = scalar_lea.vmem %s1, 38
    %81 = vst.msk [vmem:[%s80] sm:$0x2] %vm77, %v76
    %s82 = scalar_lea.vmem %s1, 69
    %83 = vst.msk [vmem:[%s82] sm:$0x4] %vm77, %v76
    %v84 = vld [vmem:[#allocation0] sm:$0x7]
    %85 = vrot.lane.b32.xlu0 %v84, 120
    %v86 = vpop.permute.xlu0 %85
    %vm87 = vcmask 7168
    %s88 = scalar_lea.vmem %s1, 8
    %89 = vst.msk [vmem:[%s88] sm:$0x1] %vm87, %v86
    %s90 = scalar_lea.vmem %s1, 39
    %91 = vst.msk [vmem:[%s90] sm:$0x2] %vm87, %v86
    %s92 = scalar_lea.vmem %s1, 70
    %93 = vst.msk [vmem:[%s92] sm:$0x4] %vm87, %v86
    %v94 = vld [vmem:[#allocation0] sm:$0x7]
    %95 = vrot.lane.b32.xlu0 %v94, 119
    %v96 = vpop.permute.xlu0 %95
    %vm97 = vcmask 7168
    %s98 = scalar_lea.vmem %s1, 9
    %99 = vst.msk [vmem:[%s98] sm:$0x1] %vm97, %v96
    %s100 = scalar_lea.vmem %s1, 40
    %101 = vst.msk [vmem:[%s100] sm:$0x2] %vm97, %v96
    %s102 = scalar_lea.vmem %s1, 71
    %103 = vst.msk [vmem:[%s102] sm:$0x4] %vm97, %v96
    %v104 = vld [vmem:[#allocation0] sm:$0x7]
    %105 = vrot.lane.b32.xlu0 %v104, 118
    %v106 = vpop.permute.xlu0 %105
    %vm107 = vcmask 7168
    %s108 = scalar_lea.vmem %s1, 10
    %109 = vst.msk [vmem:[%s108] sm:$0x1] %vm107, %v106
    %s110 = scalar_lea.vmem %s1, 41
    %111 = vst.msk [vmem:[%s110] sm:$0x2] %vm107, %v106
    %s112 = scalar_lea.vmem %s1, 72
    %113 = vst.msk [vmem:[%s112] sm:$0x4] %vm107, %v106
    %v114 = vld [vmem:[#allocation0] sm:$0x7]
    %115 = vrot.lane.b32.xlu0 %v114, 117
    %v116 = vpop.permute.xlu0 %115
    %vm117 = vcmask 7168
    %s118 = scalar_lea.vmem %s1, 11
    %119 = vst.msk [vmem:[%s118] sm:$0x1] %vm117, %v116
    %s120 = scalar_lea.vmem %s1, 42
    %121 = vst.msk [vmem:[%s120] sm:$0x2] %vm117, %v116
    %s122 = scalar_lea.vmem %s1, 73
    %123 = vst.msk [vmem:[%s122] sm:$0x4] %vm117, %v116
    %v124 = vld [vmem:[#allocation0] sm:$0x7]
    %125 = vrot.lane.b32.xlu0 %v124, 116
    %v126 = vpop.permute.xlu0 %125
    %vm127 = vcmask 7168
    %s128 = scalar_lea.vmem %s1, 12
    %129 = vst.msk [vmem:[%s128] sm:$0x1] %vm127, %v126
    %s130 = scalar_lea.vmem %s1, 43
    %131 = vst.msk [vmem:[%s130] sm:$0x2] %vm127, %v126
    %s132 = scalar_lea.vmem %s1, 74
    %133 = vst.msk [vmem:[%s132] sm:$0x4] %vm127, %v126
    %v134 = vld [vmem:[#allocation0] sm:$0x7]
    %135 = vrot.lane.b32.xlu0 %v134, 115
    %v136 = vpop.permute.xlu0 %135
    %vm137 = vcmask 7168
    %s138 = scalar_lea.vmem %s1, 13
    %139 = vst.msk [vmem:[%s138] sm:$0x1] %vm137, %v136
    %s140 = scalar_lea.vmem %s1, 44
    %141 = vst.msk [vmem:[%s140] sm:$0x2] %vm137, %v136
    %s142 = scalar_lea.vmem %s1, 75
    %143 = vst.msk [vmem:[%s142] sm:$0x4] %vm137, %v136
    %v144 = vld [vmem:[#allocation0] sm:$0x7]
    %145 = vrot.lane.b32.xlu0 %v144, 114
    %v146 = vpop.permute.xlu0 %145
    %vm147 = vcmask 7168
    %s148 = scalar_lea.vmem %s1, 14
    %149 = vst.msk [vmem:[%s148] sm:$0x1] %vm147, %v146
    %s150 = scalar_lea.vmem %s1, 45
    %151 = vst.msk [vmem:[%s150] sm:$0x2] %vm147, %v146
    %s152 = scalar_lea.vmem %s1, 76
    %153 = vst.msk [vmem:[%s152] sm:$0x4] %vm147, %v146
    %v154 = vld [vmem:[#allocation0] sm:$0x7]
    %155 = vrot.lane.b32.xlu0 %v154, 113
    %v156 = vpop.permute.xlu0 %155
    %vm157 = vcmask 7168
    %s158 = scalar_lea.vmem %s1, 15
    %159 = vst.msk [vmem:[%s158] sm:$0x1] %vm157, %v156
    %s160 = scalar_lea.vmem %s1, 46
    %161 = vst.msk [vmem:[%s160] sm:$0x2] %vm157, %v156
    %s162 = scalar_lea.vmem %s1, 77
    %163 = vst.msk [vmem:[%s162] sm:$0x4] %vm157, %v156
    %v164 = vld [vmem:[#allocation0] sm:$0x7]
    %165 = vrot.lane.b32.xlu0 %v164, 112
    %v166 = vpop.permute.xlu0 %165
    %vm167 = vcmask 7168
    %s168 = scalar_lea.vmem %s1, 16
    %169 = vst.msk [vmem:[%s168] sm:$0x1] %vm167, %v166
    %s170 = scalar_lea.vmem %s1, 47
    %171 = vst.msk [vmem:[%s170] sm:$0x2] %vm167, %v166
    %s172 = scalar_lea.vmem %s1, 78
    %173 = vst.msk [vmem:[%s172] sm:$0x4] %vm167, %v166
    %v174 = vld [vmem:[#allocation0] sm:$0x7]
    %175 = vrot.lane.b32.xlu0 %v174, 111
    %v176 = vpop.permute.xlu0 %175
    %vm177 = vcmask 7168
    %s178 = scalar_lea.vmem %s1, 17
    %179 = vst.msk [vmem:[%s178] sm:$0x1] %vm177, %v176
    %s180 = scalar_lea.vmem %s1, 48
    %181 = vst.msk [vmem:[%s180] sm:$0x2] %vm177, %v176
    %s182 = scalar_lea.vmem %s1, 79
    %183 = vst.msk [vmem:[%s182] sm:$0x4] %vm177, %v176
    %v184 = vld [vmem:[#allocation0] sm:$0x7]
    %185 = vrot.lane.b32.xlu0 %v184, 110
    %v186 = vpop.permute.xlu0 %185
    %vm187 = vcmask 7168
    %s188 = scalar_lea.vmem %s1, 18
    %189 = vst.msk [vmem:[%s188] sm:$0x1] %vm187, %v186
    %s190 = scalar_lea.vmem %s1, 49
    %191 = vst.msk [vmem:[%s190] sm:$0x2] %vm187, %v186
    %s192 = scalar_lea.vmem %s1, 80
    %193 = vst.msk [vmem:[%s192] sm:$0x4] %vm187, %v186
    %v194 = vld [vmem:[#allocation0] sm:$0x7]
    %195 = vrot.lane.b32.xlu0 %v194, 109
    %v196 = vpop.permute.xlu0 %195
    %vm197 = vcmask 7168
    %s198 = scalar_lea.vmem %s1, 19
    %199 = vst.msk [vmem:[%s198] sm:$0x1] %vm197, %v196
    %s200 = scalar_lea.vmem %s1, 50
    %201 = vst.msk [vmem:[%s200] sm:$0x2] %vm197, %v196
    %s202 = scalar_lea.vmem %s1, 81
    %203 = vst.msk [vmem:[%s202] sm:$0x4] %vm197, %v196
    %v204 = vld [vmem:[#allocation0] sm:$0x7]
    %205 = vrot.lane.b32.xlu0 %v204, 108
    %v206 = vpop.permute.xlu0 %205
    %vm207 = vcmask 7168
    %s208 = scalar_lea.vmem %s1, 20
    %209 = vst.msk [vmem:[%s208] sm:$0x1] %vm207, %v206
    %s210 = scalar_lea.vmem %s1, 51
    %211 = vst.msk [vmem:[%s210] sm:$0x2] %vm207, %v206
    %s212 = scalar_lea.vmem %s1, 82
    %213 = vst.msk [vmem:[%s212] sm:$0x4] %vm207, %v206
    %v214 = vld [vmem:[#allocation0] sm:$0x7]
    %215 = vrot.lane.b32.xlu0 %v214, 107
    %v216 = vpop.permute.xlu0 %215
    %vm217 = vcmask 7168
    %s218 = scalar_lea.vmem %s1, 21
    %219 = vst.msk [vmem:[%s218] sm:$0x1] %vm217, %v216
    %s220 = scalar_lea.vmem %s1, 52
    %221 = vst.msk [vmem:[%s220] sm:$0x2] %vm217, %v216
    %s222 = scalar_lea.vmem %s1, 83
    %223 = vst.msk [vmem:[%s222] sm:$0x4] %vm217, %v216
    %v224 = vld [vmem:[#allocation0] sm:$0x7]
    %225 = vrot.lane.b32.xlu0 %v224, 106
    %v226 = vpop.permute.xlu0 %225
    %vm227 = vcmask 7168
    %s228 = scalar_lea.vmem %s1, 22
    %229 = vst.msk [vmem:[%s228] sm:$0x1] %vm227, %v226
    %s230 = scalar_lea.vmem %s1, 53
    %231 = vst.msk [vmem:[%s230] sm:$0x2] %vm227, %v226
    %s232 = scalar_lea.vmem %s1, 84
    %233 = vst.msk [vmem:[%s232] sm:$0x4] %vm227, %v226
    %v234 = vld [vmem:[#allocation0] sm:$0x7]
    %235 = vrot.lane.b32.xlu0 %v234, 105
    %v236 = vpop.permute.xlu0 %235
    %vm237 = vcmask 7168
    %s238 = scalar_lea.vmem %s1, 23
    %239 = vst.msk [vmem:[%s238] sm:$0x1] %vm237, %v236
    %s240 = scalar_lea.vmem %s1, 54
    %241 = vst.msk [vmem:[%s240] sm:$0x2] %vm237, %v236
    %s242 = scalar_lea.vmem %s1, 85
    %243 = vst.msk [vmem:[%s242] sm:$0x4] %vm237, %v236
    %v244 = vld [vmem:[#allocation0] sm:$0x7]
    %245 = vrot.lane.b32.xlu0 %v244, 104
    %v246 = vpop.permute.xlu0 %245
    %vm247 = vcmask 7168
    %s248 = scalar_lea.vmem %s1, 24
    %249 = vst.msk [vmem:[%s248] sm:$0x1] %vm247, %v246
    %s250 = scalar_lea.vmem %s1, 55
    %251 = vst.msk [vmem:[%s250] sm:$0x2] %vm247, %v246
    %s252 = scalar_lea.vmem %s1, 86
    %253 = vst.msk [vmem:[%s252] sm:$0x4] %vm247, %v246
    %v254 = vld [vmem:[#allocation0] sm:$0x7]
    %255 = vrot.lane.b32.xlu0 %v254, 103
    %v256 = vpop.permute.xlu0 %255
    %vm257 = vcmask 7168
    %s258 = scalar_lea.vmem %s1, 25
    %259 = vst.msk [vmem:[%s258] sm:$0x1] %vm257, %v256
    %s260 = scalar_lea.vmem %s1, 56
    %261 = vst.msk [vmem:[%s260] sm:$0x2] %vm257, %v256
    %s262 = scalar_lea.vmem %s1, 87
    %263 = vst.msk [vmem:[%s262] sm:$0x4] %vm257, %v256
    %v264 = vld [vmem:[#allocation0] sm:$0x7]
    %265 = vrot.lane.b32.xlu0 %v264, 102
    %v266 = vpop.permute.xlu0 %265
    %vm267 = vcmask 7168
    %s268 = scalar_lea.vmem %s1, 26
    %269 = vst.msk [vmem:[%s268] sm:$0x1] %vm267, %v266
    %s270 = scalar_lea.vmem %s1, 57
    %271 = vst.msk [vmem:[%s270] sm:$0x2] %vm267, %v266
    %s272 = scalar_lea.vmem %s1, 88
    %273 = vst.msk [vmem:[%s272] sm:$0x4] %vm267, %v266
    %v274 = vld [vmem:[#allocation0] sm:$0x7]
    %275 = vrot.lane.b32.xlu0 %v274, 101
    %v276 = vpop.permute.xlu0 %275
    %vm277 = vcmask 7168
    %s278 = scalar_lea.vmem %s1, 27
    %279 = vst.msk [vmem:[%s278] sm:$0x1] %vm277, %v276
    %s280 = scalar_lea.vmem %s1, 58
    %281 = vst.msk [vmem:[%s280] sm:$0x2] %vm277, %v276
    %s282 = scalar_lea.vmem %s1, 89
    %283 = vst.msk [vmem:[%s282] sm:$0x4] %vm277, %v276
    %v284 = vld [vmem:[#allocation0] sm:$0x7]
    %285 = vrot.lane.b32.xlu0 %v284, 100
    %v286 = vpop.permute.xlu0 %285
    %vm287 = vcmask 7168
    %s288 = scalar_lea.vmem %s1, 28
    %289 = vst.msk [vmem:[%s288] sm:$0x1] %vm287, %v286
    %s290 = scalar_lea.vmem %s1, 59
    %291 = vst.msk [vmem:[%s290] sm:$0x2] %vm287, %v286
    %s292 = scalar_lea.vmem %s1, 90
    %293 = vst.msk [vmem:[%s292] sm:$0x4] %vm287, %v286
    %v294 = vld [vmem:[#allocation0] sm:$0x7]
    %295 = vrot.lane.b32.xlu0 %v294, 99
    %v296 = vpop.permute.xlu0 %295
    %vm297 = vcmask 7168
    %s298 = scalar_lea.vmem %s1, 29
    %299 = vst.msk [vmem:[%s298] sm:$0x1] %vm297, %v296
    %s300 = scalar_lea.vmem %s1, 60
    %301 = vst.msk [vmem:[%s300] sm:$0x2] %vm297, %v296
    %s302 = scalar_lea.vmem %s1, 91
    %303 = vst.msk [vmem:[%s302] sm:$0x4] %vm297, %v296
    %v304 = vld [vmem:[#allocation0] sm:$0x7]
    %305 = vrot.lane.b32.xlu0 %v304, 98
    %v306 = vpop.permute.xlu0 %305
    %vm307 = vcmask 7168
    %s308 = scalar_lea.vmem %s1, 30
    %309 = vst.msk [vmem:[%s308] sm:$0x1] %vm307, %v306
    %s310 = scalar_lea.vmem %s1, 61
    %311 = vst.msk [vmem:[%s310] sm:$0x2] %vm307, %v306
    %s312 = scalar_lea.vmem %s1, 92
    %313 = vst.msk [vmem:[%s312] sm:$0x4] %vm307, %v306
    %v314 = vld [vmem:[#allocation0] sm:$0x7]
    %315 = vrot.lane.b32.xlu0 %v314, 97
    %v316 = vpop.permute.xlu0 %315
    %vm317 = vcmask 7168
    %s318 = scalar_lea.vmem %s1, 31
    %319 = vst.msk [vmem:[%s318] sm:$0x1] %vm317, %v316
    %s320 = scalar_lea.vmem %s1, 62
    %321 = vst.msk [vmem:[%s320] sm:$0x2] %vm317, %v316
    %s322 = scalar_lea.vmem %s1, 93
    %323 = vst.msk [vmem:[%s322] sm:$0x4] %vm317, %v316

// kernel: graph_model_pallas.1
$region0: #{graph_model_pallas.1}
  #allocation0 [shape = 'u32[]', space=smem, size = 0x4, offset = 0x4, fixed_abs, tag = 'smem constant byte address 0x4 - core index']
  #allocation1 [shape = 'u32[144,128]{1,0:T(1,128)}', space=vmem, size = 0x12000, scoped, tag = 'internal scratch']
  #allocation2 [shape = 'f32[1]{0:T(128)S(6)}', space=smem, size = 0x200, scoped, tag = 'scoped memory for graph_model_pallas.1']
  %s0 = inlined_call_operand.vmem [shape: f32[2,96,256], index: 0, kind: input, shape index: {}]
  %s1 = inlined_call_operand.vmem [shape: bf16[384,96], index: 1, kind: input, shape index: {}]
  %s2 = inlined_call_operand.vmem [shape: bf16[288,96], index: 2, kind: input, shape index: {}]
  %s3 = inlined_call_operand.vmem [shape: bf16[96,96], index: 3, kind: input, shape index: {}]
  %s4 = inlined_call_operand.vmem [shape: f32[192,1], index: 4, kind: input, shape index: {}]
  %s5 = inlined_call_operand.vmem [shape: f32[96,1], index: 5, kind: input, shape index: {}]
  %s6 = inlined_call_operand.<no memory space> [shape: f32[1], index: 6, kind: input, shape index: {}]
  %s7 = inlined_call_operand.vmem [shape: f32[2,96,256], index: 7, kind: output, shape index: {}]
  %s8 = sld [smem:[#allocation0]]
  $region61: #{graph_model_pallas.1} parent=0
    _
  %s10 = ssub.s32 1, %s8
  %s11 = scalar_select 0, %s10, %s8
  %12 = sst [smem:[#allocation2]] %s6
  loop: start=0, step=1, limit=4
  $region2: #{graph_model_pallas.1} parent=0 // loop_pre_header
    _
  $region3: #{graph_model_pallas.1} parent=0 // loop_header
    %s14 = sphi 0, %s18
    %p15 = scmp.ge.s32.totalorder %s14, 4
    %s21 = sphi 0, %s33
    %s22 = sphi 0, %s29
    %s23 = sphi 0, %s21
    %s24 = sphi 0, %s22
    %s25 = sphi 0, %s23
    %s26 = sphi 0, %s24
    %s38 = sphi 0, %s40
    %s41 = sphi 0, %s38
    %s42 = sphi 0, %s41
    %s58 = sphi 0, %s42
    %s62 = sphi 0, %s62
    %s64 = sphi 0, %s62
    %s65 = sphi 0, %s64
    %s79 = sphi 0, %s65
    %s83 = sphi 0, %s83
    %s85 = sphi 0, %s83
    %s86 = sphi 0, %s85
    %s100 = sphi 0, %s86
    %s104 = sphi 0, %s104
    %s106 = sphi 0, %s104
    %s107 = sphi 0, %s106
    %s121 = sphi 0, %s107
    %s125 = sphi 0, %s125
    %s127 = sphi 0, %s125
    %s128 = sphi 0, %s127
    %s142 = sphi 0, %s128
    %s146 = sphi 0, %s146
    %s148 = sphi 0, %s146
    %s149 = sphi 0, %s148
    %s163 = sphi 0, %s149
    %s167 = sphi 0, %s167
    %s169 = sphi 0, %s167
    %s170 = sphi 0, %s169
    %s184 = sphi 0, %s170
    %s192 = sphi 0, %s194
    %s195 = sphi 0, %s192
    %s196 = sphi 0, %s195
    %s212 = sphi 0, %s196
  $region4: #{graph_model_pallas.1} parent=0 // loop_header_branch
    %17 = sbr.rel (%p15) target = $region8
  $region5: #{graph_model_pallas.1} parent=0 // loop_body
    %s19 = ssub.s32 %s14, 1
    %s20 = ssub.s32 %s14, 2
    %s27 = sadd.s32 1, %s22
    %p28 = scmp.ge.s32.totalorder %s27, 1
    %s29 = scalar_select %p28, 0, %s27
    %s30 = sadd.s32 1, %s21
    %s31 = scalar_select %p28, %s30, %s21
    %p32 = scmp.ge.s32.totalorder %s31, 2
    %s33 = scalar_select %p32, 0, %s31
    %s34 = ssub.s32 %s21, %s33
    %s35 = ssub.s32 %s22, %s29
    %s36 = sor.u32 %s34, %s35
    %p37 = scmp.eq.s32.totalorder %s36, 0
    %s39 = sadd.s32 %s38, 1
    %s40 = scalar_select %p37, %s38, %s39
    %p43 = pneg %p37
    %p44 = scmp.eq.s32.totalorder %s14, 1
    %p45 = por %p43, %p44
    %p46 = scmp.ne.s32.totalorder %s38, %s41
    %p47 = scmp.eq.s32.totalorder %s14, 0
    %p48 = por %p46, %p47
    %p49 = scmp.ne.s32.totalorder %s38, %s41
    %p50 = scmp.eq.s32.totalorder %s19, 1
    %p51 = por %p49, %p50
    %p52 = scmp.ne.s32.totalorder %s41, %s42
    %p53 = scmp.eq.s32.totalorder %s19, 0
    %p54 = por %p52, %p53
    %p55 = scmp.ne.s32.totalorder %s41, %s42
    %p56 = scmp.eq.s32.totalorder %s20, 1
    %p57 = por %p55, %p56
    %p59 = scmp.ne.s32.totalorder %s42, %s58
    %p60 = scmp.eq.s32.totalorder %s20, 0
    %p61 = por %p59, %p60
    %s63 = sadd.s32 %s62, 1
    %p66 = scmp.eq.s32.totalorder %s14, 1
    %p67 = scmp.ne.s32.totalorder %s62, %s64
    %p68 = scmp.eq.s32.totalorder %s14, 0
    %p69 = por %p67, %p68
    %p70 = scmp.ne.s32.totalorder %s62, %s64
    %p71 = scmp.eq.s32.totalorder %s19, 1
    %p72 = por %p70, %p71
    %p73 = scmp.ne.s32.totalorder %s64, %s65
    %p74 = scmp.eq.s32.totalorder %s19, 0
    %p75 = por %p73, %p74
    %p76 = scmp.ne.s32.totalorder %s64, %s65
    %p77 = scmp.eq.s32.totalorder %s20, 1
    %p78 = por %p76, %p77
    %p80 = scmp.ne.s32.totalorder %s65, %s79
    %p81 = scmp.eq.s32.totalorder %s20, 0
    %p82 = por %p80, %p81
    %s84 = sadd.s32 %s83, 1
    %p87 = scmp.eq.s32.totalorder %s14, 1
    %p88 = scmp.ne.s32.totalorder %s83, %s85
    %p89 = scmp.eq.s32.totalorder %s14, 0
    %p90 = por %p88, %p89
    %p91 = scmp.ne.s32.totalorder %s83, %s85
    %p92 = scmp.eq.s32.totalorder %s19, 1
    %p93 = por %p91, %p92
    %p94 = scmp.ne.s32.totalorder %s85, %s86
    %p95 = scmp.eq.s32.totalorder %s19, 0
    %p96 = por %p94, %p95
    %p97 = scmp.ne.s32.totalorder %s85, %s86
    %p98 = scmp.eq.s32.totalorder %s20, 1
    %p99 = por %p97, %p98
    %p101 = scmp.ne.s32.totalorder %s86, %s100
    %p102 = scmp.eq.s32.totalorder %s20, 0
    %p103 = por %p101, %p102
    %s105 = sadd.s32 %s104, 1
    %p108 = scmp.eq.s32.totalorder %s14, 1
    %p109 = scmp.ne.s32.totalorder %s104, %s106
    %p110 = scmp.eq.s32.totalorder %s14, 0
    %p111 = por %p109, %p110
    %p112 = scmp.ne.s32.totalorder %s104, %s106
    %p113 = scmp.eq.s32.totalorder %s19, 1
    %p114 = por %p112, %p113
    %p115 = scmp.ne.s32.totalorder %s106, %s107
    %p116 = scmp.eq.s32.totalorder %s19, 0
    %p117 = por %p115, %p116
    %p118 = scmp.ne.s32.totalorder %s106, %s107
    %p119 = scmp.eq.s32.totalorder %s20, 1
    %p120 = por %p118, %p119
    %p122 = scmp.ne.s32.totalorder %s107, %s121
    %p123 = scmp.eq.s32.totalorder %s20, 0
    %p124 = por %p122, %p123
    %s126 = sadd.s32 %s125, 1
    %p129 = scmp.eq.s32.totalorder %s14, 1
    %p130 = scmp.ne.s32.totalorder %s125, %s127
    %p131 = scmp.eq.s32.totalorder %s14, 0
    %p132 = por %p130, %p131
    %p133 = scmp.ne.s32.totalorder %s125, %s127
    %p134 = scmp.eq.s32.totalorder %s19, 1
    %p135 = por %p133, %p134
    %p136 = scmp.ne.s32.totalorder %s127, %s128
    %p137 = scmp.eq.s32.totalorder %s19, 0
    %p138 = por %p136, %p137
    %p139 = scmp.ne.s32.totalorder %s127, %s128
    %p140 = scmp.eq.s32.totalorder %s20, 1
    %p141 = por %p139, %p140
    %p143 = scmp.ne.s32.totalorder %s128, %s142
    %p144 = scmp.eq.s32.totalorder %s20, 0
    %p145 = por %p143, %p144
    %s147 = sadd.s32 %s146, 1
    %p150 = scmp.eq.s32.totalorder %s14, 1
    %p151 = scmp.ne.s32.totalorder %s146, %s148
    %p152 = scmp.eq.s32.totalorder %s14, 0
    %p153 = por %p151, %p152
    %p154 = scmp.ne.s32.totalorder %s146, %s148
    %p155 = scmp.eq.s32.totalorder %s19, 1
    %p156 = por %p154, %p155
    %p157 = scmp.ne.s32.totalorder %s148, %s149
    %p158 = scmp.eq.s32.totalorder %s19, 0
    %p159 = por %p157, %p158
    %p160 = scmp.ne.s32.totalorder %s148, %s149
    %p161 = scmp.eq.s32.totalorder %s20, 1
    %p162 = por %p160, %p161
    %p164 = scmp.ne.s32.totalorder %s149, %s163
    %p165 = scmp.eq.s32.totalorder %s20, 0
    %p166 = por %p164, %p165
    %s168 = sadd.s32 %s167, 1
    %p171 = scmp.eq.s32.totalorder %s14, 1
    %p172 = scmp.ne.s32.totalorder %s167, %s169
    %p173 = scmp.eq.s32.totalorder %s14, 0
    %p174 = por %p172, %p173
    %p175 = scmp.ne.s32.totalorder %s167, %s169
    %p176 = scmp.eq.s32.totalorder %s19, 1
    %p177 = por %p175, %p176
    %p178 = scmp.ne.s32.totalorder %s169, %s170
    %p179 = scmp.eq.s32.totalorder %s19, 0
    %p180 = por %p178, %p179
    %p181 = scmp.ne.s32.totalorder %s169, %s170
    %p182 = scmp.eq.s32.totalorder %s20, 1
    %p183 = por %p181, %p182
    %p185 = scmp.ne.s32.totalorder %s170, %s184
    %p186 = scmp.eq.s32.totalorder %s20, 0
    %p187 = por %p185, %p186
    %s188 = ssub.s32 %s21, %s33
    %s189 = ssub.s32 %s22, %s29
    %s190 = sor.u32 %s188, %s189
    %p191 = scmp.eq.s32.totalorder %s190, 0
    %s193 = sadd.s32 %s192, 1
    %s194 = scalar_select %p191, %s192, %s193
    %p197 = pneg %p191
    %p198 = scmp.eq.s32.totalorder %s14, 1
    %p199 = por %p197, %p198
    %p200 = scmp.ne.s32.totalorder %s192, %s195
    %p201 = scmp.eq.s32.totalorder %s14, 0
    %p202 = por %p200, %p201
    %p203 = scmp.ne.s32.totalorder %s192, %s195
    %p204 = scmp.eq.s32.totalorder %s19, 1
    %p205 = por %p203, %p204
    %p206 = scmp.ne.s32.totalorder %s195, %s196
    %p207 = scmp.eq.s32.totalorder %s19, 0
    %p208 = por %p206, %p207
    %p209 = scmp.ne.s32.totalorder %s195, %s196
    %p210 = scmp.eq.s32.totalorder %s20, 1
    %p211 = por %p209, %p210
    %p213 = scmp.ne.s32.totalorder %s196, %s212
    %p214 = scmp.eq.s32.totalorder %s20, 0
    %p215 = por %p213, %p214
    %p216 = scmp.le.s32.totalorder 1, %s14
    %p217 = scmp.lt.s32.totalorder %s14, 3
    %p218 = pnand %p216, %p217
    %p219 = pneg %p218
    // Predicated region
    $region9: #{graph_model_pallas.1} parent=5 // pred_check
      _
    $region10: #{graph_model_pallas.1} parent=5 // pred_check_branch
      %221 = sbr.rel (%p218) target = $region12
    $region11: #{graph_model_pallas.1} parent=5 // pred_region
      %s222 = ssub.s32 %s14, 1
      // Predicated region
      $region13: #{graph_model_pallas.1} parent=11 // pred_check
        %p223 = pneg %p75
      $region14: #{graph_model_pallas.1} parent=11 // pred_check_branch
        %225 = sbr.rel (%p223) target = $region16
      $region15: #{graph_model_pallas.1} parent=11 // pred_region
        _
      $region16: #{graph_model_pallas.1} parent=11 // pred_fallthru
        _
      // Predicated region
      $region17: #{graph_model_pallas.1} parent=11 // pred_check
        %p226 = pneg %p96
      $region18: #{graph_model_pallas.1} parent=11 // pred_check_branch
        %228 = sbr.rel (%p226) target = $region20
      $region19: #{graph_model_pallas.1} parent=11 // pred_region
        _
      $region20: #{graph_model_pallas.1} parent=11 // pred_fallthru
        _
      // Predicated region
      $region21: #{graph_model_pallas.1} parent=11 // pred_check
        %p229 = pneg %p117
      $region22: #{graph_model_pallas.1} parent=11 // pred_check_branch
        %231 = sbr.rel (%p229) target = $region24
      $region23: #{graph_model_pallas.1} parent=11 // pred_region
        _
      $region24: #{graph_model_pallas.1} parent=11 // pred_fallthru
        _
      // Predicated region
      $region25: #{graph_model_pallas.1} parent=11 // pred_check
        %p232 = pneg %p138
      $region26: #{graph_model_pallas.1} parent=11 // pred_check_branch
        %234 = sbr.rel (%p232) target = $region28
      $region27: #{graph_model_pallas.1} parent=11 // pred_region
        _
      $region28: #{graph_model_pallas.1} parent=11 // pred_fallthru
        _
      // Predicated region
      $region29: #{graph_model_pallas.1} parent=11 // pred_check
        %p235 = pneg %p159
      $region30: #{graph_model_pallas.1} parent=11 // pred_check_branch
        %237 = sbr.rel (%p235) target = $region32
      $region31: #{graph_model_pallas.1} parent=11 // pred_region
        _
      $region32: #{graph_model_pallas.1} parent=11 // pred_fallthru
        _
      // Predicated region
      $region33: #{graph_model_pallas.1} parent=11 // pred_check
        %p238 = pneg %p180
      $region34: #{graph_model_pallas.1} parent=11 // pred_check_branch
        %240 = sbr.rel (%p238) target = $region36
      $region35: #{graph_model_pallas.1} parent=11 // pred_region
        _
      $region36: #{graph_model_pallas.1} parent=11 // pred_fallthru
        _
    $region12: #{graph_model_pallas.1} parent=5 // pred_fallthru
      _
    %p241 = scmp.lt.s32.totalorder %s14, 2
    // Predicated region
    $region37: #{graph_model_pallas.1} parent=5 // pred_check
      %p242 = pneg %p241
    $region38: #{graph_model_pallas.1} parent=5 // pred_check_branch
      %244 = sbr.rel (%p242) target = $region40
    $region39: #{graph_model_pallas.1} parent=5 // pred_region
      // Predicated region
      $region41: #{graph_model_pallas.1} parent=39 // pred_check
        %p245 = pneg %p48
      $region42: #{graph_model_pallas.1} parent=39 // pred_check_branch
        %247 = sbr.rel (%p245) target = $region44
      $region43: #{graph_model_pallas.1} parent=39 // pred_region
        %s248 = smul.u32 2, %s22
        %p249 = scmp.lt.s32.totalorder %s21, 1
        %s250 = scalar_select %p249, %s21, 1
        %p251 = scmp.lt.s32.totalorder %s248, 1
        %s252 = scalar_select %p251, %s248, 1
        %s253 = smul.addr %s250, 24
        %s254 = sadd.s32 %s252, %s253
        %s255 = smul.addr %s254, 8
        %s256 = scalar_lea.vmem %s0, %s255
        %s257 = smul.u32 2, %s22
      $region44: #{graph_model_pallas.1} parent=39 // pred_fallthru
        _
    $region40: #{graph_model_pallas.1} parent=5 // pred_fallthru
      _
    %p258 = scmp.le.s32.totalorder 1, %s14
    %p259 = scmp.lt.s32.totalorder %s14, 3
    %p260 = pnand %p258, %p259
    %p261 = pneg %p260
    // Predicated region
    $region45: #{graph_model_pallas.1} parent=5 // pred_check
      _
    $region46: #{graph_model_pallas.1} parent=5 // pred_check_branch
      %263 = sbr.rel (%p260) target = $region48
    $region47: #{graph_model_pallas.1} parent=5 // pred_region
      %s264 = ssub.s32 %s14, 1
      %s265 = smul.u32 2, %s24
      %p266 = scmp.lt.s32.totalorder %s23, 1
      %s267 = scalar_select %p266, %s23, 1
      %p268 = scmp.lt.s32.totalorder %s265, 1
      %s269 = scalar_select %p268, %s265, 1
      %s270 = smul.addr %s267, 24
      %s271 = sadd.s32 %s269, %s270
      %s272 = smul.addr %s271, 8
      %s273 = scalar_lea.vmem %s0, %s272
      %p274 = pneg %p54
      %p275 = pneg %p51
      %p276 = pneg %p75
      %p277 = pneg %p72
      %p278 = pneg %p96
      %p279 = pneg %p93
      %p280 = pneg %p117
      %p281 = pneg %p114
      %p282 = pneg %p138
      %p283 = pneg %p135
      %p284 = pneg %p159
      %p285 = pneg %p156
      %p286 = pneg %p180
      %p287 = pneg %p177
      %p288 = pneg %p208
      %p289 = pneg %p205
      %s290 = smul.u32 2, %s24
      %p291 = scmp.lt.s32.totalorder %s23, 1
      %s292 = scalar_select %p291, %s23, 1
      %p293 = scmp.lt.s32.totalorder %s290, 1
      %s294 = scalar_select %p293, %s290, 1
      %s295 = smul.addr %s292, 24
      %s296 = sadd.s32 %s294, %s295
      %s297 = smul.addr %s296, 8
      %s298 = scalar_lea.vmem %s7, %s297
      %s299 = smul.u32 2, %s24
      %p300 = scmp.lt.s32.totalorder %s23, 1
      %s301 = scalar_select %p300, %s23, 1
      %p302 = scmp.lt.s32.totalorder %s299, 1
      %s303 = scalar_select %p302, %s299, 1
      %s304 = smul.addr %s301, 24
      %s305 = sadd.s32 %s303, %s304
      %s306 = smul.addr %s305, 8
      %s307 = scalar_lea.vmem %s0, %s306
      %s308 = smul.u32 2, %s24
      %s309 = smul.u32 2, %s24
      %p310 = scmp.lt.s32.totalorder %s23, 1
      %s311 = scalar_select %p310, %s23, 1
      %p312 = scmp.lt.s32.totalorder %s309, 1
      %s313 = scalar_select %p312, %s309, 1
      %s314 = smul.addr %s311, 24
      %s315 = sadd.s32 %s313, %s314
      %s316 = smul.addr %s315, 8
      %s317 = scalar_lea.vmem %s7, %s316
      %s318 = smul.u32 2, %s24
      %s320 = sld [smem:[#allocation2]]
      %v321 = vld [vmem:[%s307] sm:$0xff]
      %v322 = vld [vmem:[%s307 + $0x8] sm:$0xff]
      %v323 = vld [vmem:[%s307 + $0x10] sm:$0xff]
      %v324 = vld [vmem:[%s307 + $0x18] sm:$0xff]
      %v325 = vld [vmem:[%s307 + $0x20] sm:$0xff]
      %v326 = vld [vmem:[%s307 + $0x28] sm:$0xff]
      %v327 = vld [vmem:[%s307 + $0x30] sm:$0xff]
      %v328 = vld [vmem:[%s307 + $0x38] sm:$0xff]
      %v329 = vld [vmem:[%s307 + $0x40] sm:$0xff]
      %v330 = vld [vmem:[%s307 + $0x48] sm:$0xff]
      %v331 = vld [vmem:[%s307 + $0x50] sm:$0xff]
      %v332 = vld [vmem:[%s307 + $0x58] sm:$0xff]
      %v333 = vld [vmem:[%s307 + $0x60] sm:$0xff]
      %v334 = vld [vmem:[%s307 + $0x68] sm:$0xff]
      %v335 = vld [vmem:[%s307 + $0x70] sm:$0xff]
      %v336 = vld [vmem:[%s307 + $0x78] sm:$0xff]
      %v337 = vld [vmem:[%s307 + $0x80] sm:$0xff]
      %v338 = vld [vmem:[%s307 + $0x88] sm:$0xff]
      %v339 = vld [vmem:[%s307 + $0x90] sm:$0xff]
      %v340 = vld [vmem:[%s307 + $0x98] sm:$0xff]
      %v341 = vld [vmem:[%s307 + $0xa0] sm:$0xff]
      %v342 = vld [vmem:[%s307 + $0xa8] sm:$0xff]
      %v343 = vld [vmem:[%s307 + $0xb0] sm:$0xff]
      %v344 = vld [vmem:[%s307 + $0xb8] sm:$0xff]
      %v345 = vpack.c.bf16 %v323, %v321
      %v346 = vpack.c.bf16 %v324, %v322
      %v347 = vpack.c.bf16 %v327, %v325
      %v348 = vpack.c.bf16 %v328, %v326
      %v349 = vpack.c.bf16 %v331, %v329
      %v350 = vpack.c.bf16 %v332, %v330
      %v351 = vpack.c.bf16 %v335, %v333
      %v352 = vpack.c.bf16 %v336, %v334
      %v353 = vpack.c.bf16 %v339, %v337
      %v354 = vpack.c.bf16 %v340, %v338
      %v355 = vpack.c.bf16 %v343, %v341
      %v356 = vpack.c.bf16 %v344, %v342
      %v357 = vld [vmem:[%s1] sm:$0xf]
      %v358 = vld [vmem:[%s1 + $0x4] sm:$0xf]
      %v359 = vld [vmem:[%s1 + $0x8] sm:$0xf]
      %v360 = vld [vmem:[%s1 + $0xc] sm:$0xf]
      %v361 = vld [vmem:[%s1 + $0x10] sm:$0xf]
      %v362 = vld [vmem:[%s1 + $0x14] sm:$0xf]
      %v363 = vld [vmem:[%s1 + $0x18] sm:$0xf]
      %v364 = vld [vmem:[%s1 + $0x1c] sm:$0xf]
      %v365 = vld [vmem:[%s1 + $0x20] sm:$0xf]
      %v366 = vld [vmem:[%s1 + $0x24] sm:$0xf]
      %v367 = vld [vmem:[%s1 + $0x28] sm:$0xf]
      %v368 = vld [vmem:[%s1 + $0x2c] sm:$0xf]
      %v369 = vld [vmem:[%s1 + $0x30] sm:$0xf]
      %v370 = vld [vmem:[%s1 + $0x34] sm:$0xf]
      %v371 = vld [vmem:[%s1 + $0x38] sm:$0xf]
      %v372 = vld [vmem:[%s1 + $0x3c] sm:$0xf]
      %v373 = vld [vmem:[%s1 + $0x40] sm:$0xf]
      %v374 = vld [vmem:[%s1 + $0x44] sm:$0xf]
      %v375 = vld [vmem:[%s1 + $0x48] sm:$0xf]
      %v376 = vld [vmem:[%s1 + $0x4c] sm:$0xf]
      %v377 = vld [vmem:[%s1 + $0x50] sm:$0xf]
      %v378 = vld [vmem:[%s1 + $0x54] sm:$0xf]
      %v379 = vld [vmem:[%s1 + $0x58] sm:$0xf]
      %v380 = vld [vmem:[%s1 + $0x5c] sm:$0xf]
      %v381 = vld [vmem:[%s1 + $0x60] sm:$0xf]
      %v382 = vld [vmem:[%s1 + $0x64] sm:$0xf]
      %v383 = vld [vmem:[%s1 + $0x68] sm:$0xf]
      %v384 = vld [vmem:[%s1 + $0x6c] sm:$0xf]
      %v385 = vld [vmem:[%s1 + $0x70] sm:$0xf]
      %v386 = vld [vmem:[%s1 + $0x74] sm:$0xf]
      %v387 = vld [vmem:[%s1 + $0x78] sm:$0xf]
      %v388 = vld [vmem:[%s1 + $0x7c] sm:$0xf]
      %v389 = vld [vmem:[%s1 + $0x80] sm:$0xf]
      %v390 = vld [vmem:[%s1 + $0x84] sm:$0xf]
      %v391 = vld [vmem:[%s1 + $0x88] sm:$0xf]
      %v392 = vld [vmem:[%s1 + $0x8c] sm:$0xf]
      %v393 = vld [vmem:[%s1 + $0x90] sm:$0xf]
      %v394 = vld [vmem:[%s1 + $0x94] sm:$0xf]
      %v395 = vld [vmem:[%s1 + $0x98] sm:$0xf]
      %v396 = vld [vmem:[%s1 + $0x9c] sm:$0xf]
      %v397 = vld [vmem:[%s1 + $0xa0] sm:$0xf]
      %v398 = vld [vmem:[%s1 + $0xa4] sm:$0xf]
      %v399 = vld [vmem:[%s1 + $0xa8] sm:$0xf]
      %v400 = vld [vmem:[%s1 + $0xac] sm:$0xf]
      %v401 = vld [vmem:[%s1 + $0xb0] sm:$0xf]
      %v402 = vld [vmem:[%s1 + $0xb4] sm:$0xf]
      %v403 = vld [vmem:[%s1 + $0xb8] sm:$0xf]
      %v404 = vld [vmem:[%s1 + $0xbc] sm:$0xf]
      %v453 = vunpack.c.l.b16 %v357
      %v454 = vunpack.c.l.b16 %v358
      %v455 = vunpack.c.l.b16 %v359
      %v456 = vunpack.c.l.b16 %v360
      %v457 = vunpack.c.l.b16 %v361
      %v458 = vunpack.c.l.b16 %v362
      %v459 = vunpack.c.l.b16 %v363
      %v460 = vunpack.c.l.b16 %v364
      %v461 = vunpack.c.l.b16 %v365
      %v462 = vunpack.c.l.b16 %v366
      %v463 = vunpack.c.l.b16 %v367
      %v464 = vunpack.c.l.b16 %v368
      %v465 = vunpack.c.l.b16 %v369
      %v466 = vunpack.c.l.b16 %v370
      %v467 = vunpack.c.l.b16 %v371
      %v468 = vunpack.c.l.b16 %v372
      %v469 = vunpack.c.l.b16 %v373
      %v470 = vunpack.c.l.b16 %v374
      %v471 = vunpack.c.l.b16 %v375
      %v472 = vunpack.c.l.b16 %v376
      %v473 = vunpack.c.l.b16 %v377
      %v474 = vunpack.c.l.b16 %v378
      %v475 = vunpack.c.l.b16 %v379
      %v476 = vunpack.c.l.b16 %v380
      %v477 = vunpack.c.l.b16 %v381
      %v478 = vunpack.c.l.b16 %v382
      %v479 = vunpack.c.l.b16 %v383
      %v480 = vunpack.c.l.b16 %v384
      %v481 = vunpack.c.l.b16 %v385
      %v482 = vunpack.c.l.b16 %v386
      %v483 = vunpack.c.l.b16 %v387
      %v484 = vunpack.c.l.b16 %v388
      %v485 = vunpack.c.l.b16 %v389
      %v486 = vunpack.c.l.b16 %v390
      %v487 = vunpack.c.l.b16 %v391
      %v488 = vunpack.c.l.b16 %v392
      %v489 = vunpack.c.l.b16 %v393
      %v490 = vunpack.c.l.b16 %v394
      %v491 = vunpack.c.l.b16 %v395
      %v492 = vunpack.c.l.b16 %v396
      %v493 = vunpack.c.l.b16 %v397
      %v494 = vunpack.c.l.b16 %v398
      %v495 = vunpack.c.l.b16 %v399
      %v496 = vunpack.c.l.b16 %v400
      %v497 = vunpack.c.l.b16 %v401
      %v498 = vunpack.c.l.b16 %v402
      %v499 = vunpack.c.l.b16 %v403
      %v500 = vunpack.c.l.b16 %v404
      %v501 = vpack.c.b16 %v454, %v453
      %v502 = vpack.c.b16 %v456, %v455
      %v503 = vpack.c.b16 %v458, %v457
      %v504 = vpack.c.b16 %v460, %v459
      %v505 = vpack.c.b16 %v462, %v461
      %v506 = vpack.c.b16 %v464, %v463
      %v507 = vpack.c.b16 %v466, %v465
      %v508 = vpack.c.b16 %v468, %v467
      %v509 = vpack.c.b16 %v470, %v469
      %v510 = vpack.c.b16 %v472, %v471
      %v511 = vpack.c.b16 %v474, %v473
      %v512 = vpack.c.b16 %v476, %v475
      %v513 = vpack.c.b16 %v478, %v477
      %v514 = vpack.c.b16 %v480, %v479
      %v515 = vpack.c.b16 %v482, %v481
      %v516 = vpack.c.b16 %v484, %v483
      %v517 = vpack.c.b16 %v486, %v485
      %v518 = vpack.c.b16 %v488, %v487
      %v519 = vpack.c.b16 %v490, %v489
      %v520 = vpack.c.b16 %v492, %v491
      %v521 = vpack.c.b16 %v494, %v493
      %v522 = vpack.c.b16 %v496, %v495
      %v523 = vpack.c.b16 %v498, %v497
      %v524 = vpack.c.b16 %v500, %v499
      %vm525 = vcmask 785408
      %v527 = vsel %vm525, %v501, 0
      %v530 = vsel %vm525, %v502, 0
      %v533 = vsel %vm525, %v503, 0
      %v536 = vsel %vm525, %v504, 0
      %v539 = vsel %vm525, %v505, 0
      %v542 = vsel %vm525, %v506, 0
      %v545 = vsel %vm525, %v507, 0
      %v548 = vsel %vm525, %v508, 0
      %v551 = vsel %vm525, %v509, 0
      %v554 = vsel %vm525, %v510, 0
      %v557 = vsel %vm525, %v511, 0
      %v560 = vsel %vm525, %v512, 0
      %v563 = vsel %vm525, %v513, 0
      %v566 = vsel %vm525, %v514, 0
      %v569 = vsel %vm525, %v515, 0
      %v572 = vsel %vm525, %v516, 0
      %v575 = vsel %vm525, %v517, 0
      %v578 = vsel %vm525, %v518, 0
      %v581 = vsel %vm525, %v519, 0
      %v584 = vsel %vm525, %v520, 0
      %v587 = vsel %vm525, %v521, 0
      %v590 = vsel %vm525, %v522, 0
      %v593 = vsel %vm525, %v523, 0
      %v596 = vsel %vm525, %v524, 0
      %598 = vmatprep.subr.bf16.mxu0 0
      %599 = vmatpush1.bf16.msra.mxu0 0
      %600 = vmatprep.subr.bf16.mxu0 0
      %601 = vmatpush1.bf16.msra.mxu0 0
      %602 = vmatprep.subr.bf16.mxu0 %v356
      %603 = vmatpush1.bf16.msra.mxu0 %v355
      %604 = vmatprep.subr.bf16.mxu0 %v354
      %605 = vmatpush1.bf16.msra.mxu0 %v353
      %606 = vmatprep.subr.bf16.mxu0 %v352
      %607 = vmatpush1.bf16.msra.mxu0 %v351
      %608 = vmatprep.subr.bf16.mxu0 %v350
      %609 = vmatpush1.bf16.msra.mxu0 %v349
      %610 = vmatprep.subr.bf16.mxu0 %v348
      %611 = vmatpush1.bf16.msra.mxu0 %v347
      %612 = vmatprep.subr.bf16.mxu0 %v346
      %613 = vmatpush1.bf16.msra.mxu0 %v345
      %614 = vmatprep.subr.bf16.mxu0 0
      %615 = vmatpush2.bf16.msra.mxu0 0
      %616 = vmatprep.subr.bf16.mxu0 0
      %617 = vmatpush2.bf16.msra.mxu0 0
      %618 = vmatprep.subr.bf16.mxu0 0
      %619 = vmatpush2.bf16.msra.mxu0 0
      %620 = vmatprep.subr.bf16.mxu0 0
      %621 = vmatpush2.bf16.msra.mxu0 0
      %622 = vmatprep.subr.bf16.mxu0 0
      %623 = vmatpush2.bf16.msra.mxu0 0
      %624 = vmatprep.subr.bf16.mxu0 0
      %625 = vmatpush2.bf16.msra.mxu0 0
      %626 = vmatprep.subr.bf16.mxu0 0
      %627 = vmatpush2.bf16.msra.mxu0 0
      %628 = vmatprep.subr.bf16.mxu0 0
      %629 = vmatpush2.bf16.msra.mxu0 0
      %630 = vmatprep.mubr.bf16.mxu0 0
      %631 = vmatmul.mubr.bf16.gmra.mxu0 %v527
      %v632 = vpop.f32.mrf.mxu0
      %v633 = vadd.f32 0.0, %v632
      %v634 = vpop.f32.mrf.mxu0
      %v635 = vadd.f32 0.0, %v634
      %v636 = vpop.f32.mrf.mxu0
      %v637 = vadd.f32 0.0, %v636
      %v638 = vpop.f32.mrf.mxu0
      %v639 = vadd.f32 0.0, %v638
      %640 = vmatprep.mubr.bf16.mxu0 0
      %641 = vmatmul.mubr.bf16.gmra.mxu0 %v530
      %v642 = vpop.f32.mrf.mxu0
      %v643 = vadd.f32 0.0, %v642
      %v644 = vpop.f32.mrf.mxu0
      %v645 = vadd.f32 0.0, %v644
      %v646 = vpop.f32.mrf.mxu0
      %v647 = vadd.f32 0.0, %v646
      %v648 = vpop.f32.mrf.mxu0
      %v649 = vadd.f32 0.0, %v648
      %650 = vmatprep.mubr.bf16.mxu0 0
      %651 = vmatmul.mubr.bf16.gmra.mxu0 %v533
      %v652 = vpop.f32.mrf.mxu0
      %v653 = vadd.f32 0.0, %v652
      %v654 = vpop.f32.mrf.mxu0
      %v655 = vadd.f32 0.0, %v654
      %v656 = vpop.f32.mrf.mxu0
      %v657 = vadd.f32 0.0, %v656
      %v658 = vpop.f32.mrf.mxu0
      %v659 = vadd.f32 0.0, %v658
      %660 = vmatprep.mubr.bf16.mxu0 0
      %661 = vmatmul.mubr.bf16.gmra.mxu0 %v536
      %v662 = vpop.f32.mrf.mxu0
      %v663 = vadd.f32 0.0, %v662
      %v664 = vpop.f32.mrf.mxu0
      %v665 = vadd.f32 0.0, %v664
      %v666 = vpop.f32.mrf.mxu0
      %v667 = vadd.f32 0.0, %v666
      %v668 = vpop.f32.mrf.mxu0
      %v669 = vadd.f32 0.0, %v668
      %670 = vmatprep.mubr.bf16.mxu0 0
      %671 = vmatmul.mubr.bf16.gmra.mxu0 %v539
      %v672 = vpop.f32.mrf.mxu0
      %v673 = vadd.f32 0.0, %v672
      %v674 = vpop.f32.mrf.mxu0
      %v675 = vadd.f32 0.0, %v674
      %v676 = vpop.f32.mrf.mxu0
      %v677 = vadd.f32 0.0, %v676
      %v678 = vpop.f32.mrf.mxu0
      %v679 = vadd.f32 0.0, %v678
      %680 = vmatprep.mubr.bf16.mxu0 0
      %681 = vmatmul.mubr.bf16.gmra.mxu0 %v542
      %v682 = vpop.f32.mrf.mxu0
      %v683 = vadd.f32 0.0, %v682
      %v684 = vpop.f32.mrf.mxu0
      %v685 = vadd.f32 0.0, %v684
      %v686 = vpop.f32.mrf.mxu0
      %v687 = vadd.f32 0.0, %v686
      %v688 = vpop.f32.mrf.mxu0
      %v689 = vadd.f32 0.0, %v688
      %690 = vmatprep.mubr.bf16.mxu0 0
      %691 = vmatmul.mubr.bf16.gmra.mxu0 %v545
      %v692 = vpop.f32.mrf.mxu0
      %v693 = vadd.f32 0.0, %v692
      %v694 = vpop.f32.mrf.mxu0
      %v695 = vadd.f32 0.0, %v694
      %v696 = vpop.f32.mrf.mxu0
      %v697 = vadd.f32 0.0, %v696
      %v698 = vpop.f32.mrf.mxu0
      %v699 = vadd.f32 0.0, %v698
      %700 = vmatprep.mubr.bf16.mxu0 0
      %701 = vmatmul.mubr.bf16.gmra.mxu0 %v548
      %v702 = vpop.f32.mrf.mxu0
      %v703 = vadd.f32 0.0, %v702
      %v704 = vpop.f32.mrf.mxu0
      %v705 = vadd.f32 0.0, %v704
      %v706 = vpop.f32.mrf.mxu0
      %v707 = vadd.f32 0.0, %v706
      %v708 = vpop.f32.mrf.mxu0
      %v709 = vadd.f32 0.0, %v708
      %710 = vmatprep.mubr.bf16.mxu0 0
      %711 = vmatmul.mubr.bf16.gmra.mxu0 %v551
      %v712 = vpop.f32.mrf.mxu0
      %v713 = vadd.f32 0.0, %v712
      %v714 = vpop.f32.mrf.mxu0
      %v715 = vadd.f32 0.0, %v714
      %v716 = vpop.f32.mrf.mxu0
      %v717 = vadd.f32 0.0, %v716
      %v718 = vpop.f32.mrf.mxu0
      %v719 = vadd.f32 0.0, %v718
      %720 = vmatprep.mubr.bf16.mxu0 0
      %721 = vmatmul.mubr.bf16.gmra.mxu0 %v554
      %v722 = vpop.f32.mrf.mxu0
      %v723 = vadd.f32 0.0, %v722
      %v724 = vpop.f32.mrf.mxu0
      %v725 = vadd.f32 0.0, %v724
      %v726 = vpop.f32.mrf.mxu0
      %v727 = vadd.f32 0.0, %v726
      %v728 = vpop.f32.mrf.mxu0
      %v729 = vadd.f32 0.0, %v728
      %730 = vmatprep.mubr.bf16.mxu0 0
      %731 = vmatmul.mubr.bf16.gmra.mxu0 %v557
      %v732 = vpop.f32.mrf.mxu0
      %v733 = vadd.f32 0.0, %v732
      %v734 = vpop.f32.mrf.mxu0
      %v735 = vadd.f32 0.0, %v734
      %v736 = vpop.f32.mrf.mxu0
      %v737 = vadd.f32 0.0, %v736
      %v738 = vpop.f32.mrf.mxu0
      %v739 = vadd.f32 0.0, %v738
      %740 = vmatprep.mubr.bf16.mxu0 0
      %741 = vmatmul.mubr.bf16.gmra.mxu0 %v560
      %v742 = vpop.f32.mrf.mxu0
      %v743 = vadd.f32 0.0, %v742
      %v744 = vpop.f32.mrf.mxu0
      %v745 = vadd.f32 0.0, %v744
      %v746 = vpop.f32.mrf.mxu0
      %v747 = vadd.f32 0.0, %v746
      %v748 = vpop.f32.mrf.mxu0
      %v749 = vadd.f32 0.0, %v748
      %750 = vmatprep.mubr.bf16.mxu0 0
      %751 = vmatmul.mubr.bf16.gmra.mxu0 %v563
      %v752 = vpop.f32.mrf.mxu0
      %v753 = vadd.f32 0.0, %v752
      %v754 = vpop.f32.mrf.mxu0
      %v755 = vadd.f32 0.0, %v754
      %v756 = vpop.f32.mrf.mxu0
      %v757 = vadd.f32 0.0, %v756
      %v758 = vpop.f32.mrf.mxu0
      %v759 = vadd.f32 0.0, %v758
      %760 = vmatprep.mubr.bf16.mxu0 0
      %761 = vmatmul.mubr.bf16.gmra.mxu0 %v566
      %v762 = vpop.f32.mrf.mxu0
      %v763 = vadd.f32 0.0, %v762
      %v764 = vpop.f32.mrf.mxu0
      %v765 = vadd.f32 0.0, %v764
      %v766 = vpop.f32.mrf.mxu0
      %v767 = vadd.f32 0.0, %v766
      %v768 = vpop.f32.mrf.mxu0
      %v769 = vadd.f32 0.0, %v768
      %770 = vmatprep.mubr.bf16.mxu0 0
      %771 = vmatmul.mubr.bf16.gmra.mxu0 %v569
      %v772 = vpop.f32.mrf.mxu0
      %v773 = vadd.f32 0.0, %v772
      %v774 = vpop.f32.mrf.mxu0
      %v775 = vadd.f32 0.0, %v774
      %v776 = vpop.f32.mrf.mxu0
      %v777 = vadd.f32 0.0, %v776
      %v778 = vpop.f32.mrf.mxu0
      %v779 = vadd.f32 0.0, %v778
      %780 = vmatprep.mubr.bf16.mxu0 0
      %781 = vmatmul.mubr.bf16.gmra.mxu0 %v572
      %v782 = vpop.f32.mrf.mxu0
      %v783 = vadd.f32 0.0, %v782
      %v784 = vpop.f32.mrf.mxu0
      %v785 = vadd.f32 0.0, %v784
      %v786 = vpop.f32.mrf.mxu0
      %v787 = vadd.f32 0.0, %v786
      %v788 = vpop.f32.mrf.mxu0
      %v789 = vadd.f32 0.0, %v788
      %790 = vmatprep.mubr.bf16.mxu0 0
      %791 = vmatmul.mubr.bf16.gmra.mxu0 %v575
      %v792 = vpop.f32.mrf.mxu0
      %v793 = vadd.f32 0.0, %v792
      %v794 = vpop.f32.mrf.mxu0
      %v795 = vadd.f32 0.0, %v794
      %v796 = vpop.f32.mrf.mxu0
      %v797 = vadd.f32 0.0, %v796
      %v798 = vpop.f32.mrf.mxu0
      %v799 = vadd.f32 0.0, %v798
      %800 = vmatprep.mubr.bf16.mxu0 0
      %801 = vmatmul.mubr.bf16.gmra.mxu0 %v578
      %v802 = vpop.f32.mrf.mxu0
      %v803 = vadd.f32 0.0, %v802
      %v804 = vpop.f32.mrf.mxu0
      %v805 = vadd.f32 0.0, %v804
      %v806 = vpop.f32.mrf.mxu0
      %v807 = vadd.f32 0.0, %v806
      %v808 = vpop.f32.mrf.mxu0
      %v809 = vadd.f32 0.0, %v808
      %810 = vmatprep.mubr.bf16.mxu0 0
      %811 = vmatmul.mubr.bf16.gmra.mxu0 %v581
      %v812 = vpop.f32.mrf.mxu0
      %v813 = vadd.f32 0.0, %v812
      %v814 = vpop.f32.mrf.mxu0
      %v815 = vadd.f32 0.0, %v814
      %v816 = vpop.f32.mrf.mxu0
      %v817 = vadd.f32 0.0, %v816
      %v818 = vpop.f32.mrf.mxu0
      %v819 = vadd.f32 0.0, %v818
      %820 = vmatprep.mubr.bf16.mxu0 0
      %821 = vmatmul.mubr.bf16.gmra.mxu0 %v584
      %v822 = vpop.f32.mrf.mxu0
      %v823 = vadd.f32 0.0, %v822
      %v824 = vpop.f32.mrf.mxu0
      %v825 = vadd.f32 0.0, %v824
      %v826 = vpop.f32.mrf.mxu0
      %v827 = vadd.f32 0.0, %v826
      %v828 = vpop.f32.mrf.mxu0
      %v829 = vadd.f32 0.0, %v828
      %830 = vmatprep.mubr.bf16.mxu0 0
      %831 = vmatmul.mubr.bf16.gmra.mxu0 %v587
      %v832 = vpop.f32.mrf.mxu0
      %v833 = vadd.f32 0.0, %v832
      %v834 = vpop.f32.mrf.mxu0
      %v835 = vadd.f32 0.0, %v834
      %v836 = vpop.f32.mrf.mxu0
      %v837 = vadd.f32 0.0, %v836
      %v838 = vpop.f32.mrf.mxu0
      %v839 = vadd.f32 0.0, %v838
      %840 = vmatprep.mubr.bf16.mxu0 0
      %841 = vmatmul.mubr.bf16.gmra.mxu0 %v590
      %v842 = vpop.f32.mrf.mxu0
      %v843 = vadd.f32 0.0, %v842
      %v844 = vpop.f32.mrf.mxu0
      %v845 = vadd.f32 0.0, %v844
      %v846 = vpop.f32.mrf.mxu0
      %v847 = vadd.f32 0.0, %v846
      %v848 = vpop.f32.mrf.mxu0
      %v849 = vadd.f32 0.0, %v848
      %850 = vmatprep.mubr.bf16.mxu0 0
      %851 = vmatmul.mubr.bf16.gmra.mxu0 %v593
      %v852 = vpop.f32.mrf.mxu0
      %v853 = vadd.f32 0.0, %v852
      %v854 = vpop.f32.mrf.mxu0
      %v855 = vadd.f32 0.0, %v854
      %v856 = vpop.f32.mrf.mxu0
      %v857 = vadd.f32 0.0, %v856
      %v858 = vpop.f32.mrf.mxu0
      %v859 = vadd.f32 0.0, %v858
      %860 = vmatprep.mubr.bf16.mxu0 0
      %861 = vmatmul.mubr.bf16.gmra.mxu0 %v596
      %v862 = vpop.f32.mrf.mxu0
      %v863 = vadd.f32 0.0, %v862
      %v864 = vpop.f32.mrf.mxu0
      %v865 = vadd.f32 0.0, %v864
      %v866 = vpop.f32.mrf.mxu0
      %v867 = vadd.f32 0.0, %v866
      %v868 = vpop.f32.mrf.mxu0
      %v869 = vadd.f32 0.0, %v868
      %870 = vdwg.mxu0
      %v871 = vxor.u32 %v633, 2147483648
      %v872 = vxor.u32 %v635, 2147483648
      %v873 = vxor.u32 %v637, 2147483648
      %v874 = vxor.u32 %v639, 2147483648
      %v875 = vxor.u32 %v643, 2147483648
      %v876 = vxor.u32 %v645, 2147483648
      %v877 = vxor.u32 %v647, 2147483648
      %v878 = vxor.u32 %v649, 2147483648
      %v879 = vxor.u32 %v653, 2147483648
      %v880 = vxor.u32 %v655, 2147483648
      %v881 = vxor.u32 %v657, 2147483648
      %v882 = vxor.u32 %v659, 2147483648
      %v883 = vxor.u32 %v663, 2147483648
      %v884 = vxor.u32 %v665, 2147483648
      %v885 = vxor.u32 %v667, 2147483648
      %v886 = vxor.u32 %v669, 2147483648
      %v887 = vxor.u32 %v673, 2147483648
      %v888 = vxor.u32 %v675, 2147483648
      %v889 = vxor.u32 %v677, 2147483648
      %v890 = vxor.u32 %v679, 2147483648
      %v891 = vxor.u32 %v683, 2147483648
      %v892 = vxor.u32 %v685, 2147483648
      %v893 = vxor.u32 %v687, 2147483648
      %v894 = vxor.u32 %v689, 2147483648
      %v895 = vxor.u32 %v693, 2147483648
      %v896 = vxor.u32 %v695, 2147483648
      %v897 = vxor.u32 %v697, 2147483648
      %v898 = vxor.u32 %v699, 2147483648
      %v899 = vxor.u32 %v703, 2147483648
      %v900 = vxor.u32 %v705, 2147483648
      %v901 = vxor.u32 %v707, 2147483648
      %v902 = vxor.u32 %v709, 2147483648
      %v903 = vxor.u32 %v713, 2147483648
      %v904 = vxor.u32 %v715, 2147483648
      %v905 = vxor.u32 %v717, 2147483648
      %v906 = vxor.u32 %v719, 2147483648
      %v907 = vxor.u32 %v723, 2147483648
      %v908 = vxor.u32 %v725, 2147483648
      %v909 = vxor.u32 %v727, 2147483648
      %v910 = vxor.u32 %v729, 2147483648
      %v911 = vxor.u32 %v733, 2147483648
      %v912 = vxor.u32 %v735, 2147483648
      %v913 = vxor.u32 %v737, 2147483648
      %v914 = vxor.u32 %v739, 2147483648
      %v915 = vxor.u32 %v743, 2147483648
      %v916 = vxor.u32 %v745, 2147483648
      %v917 = vxor.u32 %v747, 2147483648
      %v918 = vxor.u32 %v749, 2147483648
      %v919 = vmul.f32 %v871, 1.442695
      %v920 = vpow.pop %v919
      %v921 = vmul.f32 %v872, 1.442695
      %v922 = vpow.pop %v921
      %v923 = vmul.f32 %v873, 1.442695
      %v924 = vpow.pop %v923
      %v925 = vmul.f32 %v874, 1.442695
      %v926 = vpow.pop %v925
      %v927 = vmul.f32 %v875, 1.442695
      %v928 = vpow.pop %v927
      %v929 = vmul.f32 %v876, 1.442695
      %v930 = vpow.pop %v929
      %v931 = vmul.f32 %v877, 1.442695
      %v932 = vpow.pop %v931
      %v933 = vmul.f32 %v878, 1.442695
      %v934 = vpow.pop %v933
      %v935 = vmul.f32 %v879, 1.442695
      %v936 = vpow.pop %v935
      %v937 = vmul.f32 %v880, 1.442695
      %v938 = vpow.pop %v937
      %v939 = vmul.f32 %v881, 1.442695
      %v940 = vpow.pop %v939
      %v941 = vmul.f32 %v882, 1.442695
      %v942 = vpow.pop %v941
      %v943 = vmul.f32 %v883, 1.442695
      %v944 = vpow.pop %v943
      %v945 = vmul.f32 %v884, 1.442695
      %v946 = vpow.pop %v945
      %v947 = vmul.f32 %v885, 1.442695
      %v948 = vpow.pop %v947
      %v949 = vmul.f32 %v886, 1.442695
      %v950 = vpow.pop %v949
      %v951 = vmul.f32 %v887, 1.442695
      %v952 = vpow.pop %v951
      %v953 = vmul.f32 %v888, 1.442695
      %v954 = vpow.pop %v953
      %v955 = vmul.f32 %v889, 1.442695
      %v956 = vpow.pop %v955
      %v957 = vmul.f32 %v890, 1.442695
      %v958 = vpow.pop %v957
      %v959 = vmul.f32 %v891, 1.442695
      %v960 = vpow.pop %v959
      %v961 = vmul.f32 %v892, 1.442695
      %v962 = vpow.pop %v961
      %v963 = vmul.f32 %v893, 1.442695
      %v964 = vpow.pop %v963
      %v965 = vmul.f32 %v894, 1.442695
      %v966 = vpow.pop %v965
      %v967 = vmul.f32 %v895, 1.442695
      %v968 = vpow.pop %v967
      %v969 = vmul.f32 %v896, 1.442695
      %v970 = vpow.pop %v969
      %v971 = vmul.f32 %v897, 1.442695
      %v972 = vpow.pop %v971
      %v973 = vmul.f32 %v898, 1.442695
      %v974 = vpow.pop %v973
      %v975 = vmul.f32 %v899, 1.442695
      %v976 = vpow.pop %v975
      %v977 = vmul.f32 %v900, 1.442695
      %v978 = vpow.pop %v977
      %v979 = vmul.f32 %v901, 1.442695
      %v980 = vpow.pop %v979
      %v981 = vmul.f32 %v902, 1.442695
      %v982 = vpow.pop %v981
      %v983 = vmul.f32 %v903, 1.442695
      %v984 = vpow.pop %v983
      %v985 = vmul.f32 %v904, 1.442695
      %v986 = vpow.pop %v985
      %v987 = vmul.f32 %v905, 1.442695
      %v988 = vpow.pop %v987
      %v989 = vmul.f32 %v906, 1.442695
      %v990 = vpow.pop %v989
      %v991 = vmul.f32 %v907, 1.442695
      %v992 = vpow.pop %v991
      %v993 = vmul.f32 %v908, 1.442695
      %v994 = vpow.pop %v993
      %v995 = vmul.f32 %v909, 1.442695
      %v996 = vpow.pop %v995
      %v997 = vmul.f32 %v910, 1.442695
      %v998 = vpow.pop %v997
      %v999 = vmul.f32 %v911, 1.442695
      %v1000 = vpow.pop %v999
      %v1001 = vmul.f32 %v912, 1.442695
      %v1002 = vpow.pop %v1001
      %v1003 = vmul.f32 %v913, 1.442695
      %v1004 = vpow.pop %v1003
      %v1005 = vmul.f32 %v914, 1.442695
      %v1006 = vpow.pop %v1005
      %v1007 = vmul.f32 %v915, 1.442695
      %v1008 = vpow.pop %v1007
      %v1009 = vmul.f32 %v916, 1.442695
      %v1010 = vpow.pop %v1009
      %v1011 = vmul.f32 %v917, 1.442695
      %v1012 = vpow.pop %v1011
      %v1013 = vmul.f32 %v918, 1.442695
      %v1014 = vpow.pop %v1013
      %v1015 = vadd.f32 %v920, 1.0
      %v1016 = vadd.f32 %v922, 1.0
      %v1017 = vadd.f32 %v924, 1.0
      %v1018 = vadd.f32 %v926, 1.0
      %v1019 = vadd.f32 %v928, 1.0
      %v1020 = vadd.f32 %v930, 1.0
      %v1021 = vadd.f32 %v932, 1.0
      %v1022 = vadd.f32 %v934, 1.0
      %v1023 = vadd.f32 %v936, 1.0
      %v1024 = vadd.f32 %v938, 1.0
      %v1025 = vadd.f32 %v940, 1.0
      %v1026 = vadd.f32 %v942, 1.0
      %v1027 = vadd.f32 %v944, 1.0
      %v1028 = vadd.f32 %v946, 1.0
      %v1029 = vadd.f32 %v948, 1.0
      %v1030 = vadd.f32 %v950, 1.0
      %v1031 = vadd.f32 %v952, 1.0
      %v1032 = vadd.f32 %v954, 1.0
      %v1033 = vadd.f32 %v956, 1.0
      %v1034 = vadd.f32 %v958, 1.0
      %v1035 = vadd.f32 %v960, 1.0
      %v1036 = vadd.f32 %v962, 1.0
      %v1037 = vadd.f32 %v964, 1.0
      %v1038 = vadd.f32 %v966, 1.0
      %v1039 = vadd.f32 %v968, 1.0
      %v1040 = vadd.f32 %v970, 1.0
      %v1041 = vadd.f32 %v972, 1.0
      %v1042 = vadd.f32 %v974, 1.0
      %v1043 = vadd.f32 %v976, 1.0
      %v1044 = vadd.f32 %v978, 1.0
      %v1045 = vadd.f32 %v980, 1.0
      %v1046 = vadd.f32 %v982, 1.0
      %v1047 = vadd.f32 %v984, 1.0
      %v1048 = vadd.f32 %v986, 1.0
      %v1049 = vadd.f32 %v988, 1.0
      %v1050 = vadd.f32 %v990, 1.0
      %v1051 = vadd.f32 %v992, 1.0
      %v1052 = vadd.f32 %v994, 1.0
      %v1053 = vadd.f32 %v996, 1.0
      %v1054 = vadd.f32 %v998, 1.0
      %v1055 = vadd.f32 %v1000, 1.0
      %v1056 = vadd.f32 %v1002, 1.0
      %v1057 = vadd.f32 %v1004, 1.0
      %v1058 = vadd.f32 %v1006, 1.0
      %v1059 = vadd.f32 %v1008, 1.0
      %v1060 = vadd.f32 %v1010, 1.0
      %v1061 = vadd.f32 %v1012, 1.0
      %v1062 = vadd.f32 %v1014, 1.0
      %v1063 = vrcp.pop %v1015
      %v1064 = vmul.f32 1.0, %v1063
      %v1065 = vrcp.pop %v1016
      %v1066 = vmul.f32 1.0, %v1065
      %v1067 = vrcp.pop %v1017
      %v1068 = vmul.f32 1.0, %v1067
      %v1069 = vrcp.pop %v1018
      %v1070 = vmul.f32 1.0, %v1069
      %v1071 = vrcp.pop %v1019
      %v1072 = vmul.f32 1.0, %v1071
      %v1073 = vrcp.pop %v1020
      %v1074 = vmul.f32 1.0, %v1073
      %v1075 = vrcp.pop %v1021
      %v1076 = vmul.f32 1.0, %v1075
      %v1077 = vrcp.pop %v1022
      %v1078 = vmul.f32 1.0, %v1077
      %v1079 = vrcp.pop %v1023
      %v1080 = vmul.f32 1.0, %v1079
      %v1081 = vrcp.pop %v1024
      %v1082 = vmul.f32 1.0, %v1081
      %v1083 = vrcp.pop %v1025
      %v1084 = vmul.f32 1.0, %v1083
      %v1085 = vrcp.pop %v1026
      %v1086 = vmul.f32 1.0, %v1085
      %v1087 = vrcp.pop %v1027
      %v1088 = vmul.f32 1.0, %v1087
      %v1089 = vrcp.pop %v1028
      %v1090 = vmul.f32 1.0, %v1089
      %v1091 = vrcp.pop %v1029
      %v1092 = vmul.f32 1.0, %v1091
      %v1093 = vrcp.pop %v1030
      %v1094 = vmul.f32 1.0, %v1093
      %v1095 = vrcp.pop %v1031
      %v1096 = vmul.f32 1.0, %v1095
      %v1097 = vrcp.pop %v1032
      %v1098 = vmul.f32 1.0, %v1097
      %v1099 = vrcp.pop %v1033
      %v1100 = vmul.f32 1.0, %v1099
      %v1101 = vrcp.pop %v1034
      %v1102 = vmul.f32 1.0, %v1101
      %v1103 = vrcp.pop %v1035
      %v1104 = vmul.f32 1.0, %v1103
      %v1105 = vrcp.pop %v1036
      %v1106 = vmul.f32 1.0, %v1105
      %v1107 = vrcp.pop %v1037
      %v1108 = vmul.f32 1.0, %v1107
      %v1109 = vrcp.pop %v1038
      %v1110 = vmul.f32 1.0, %v1109
      %v1111 = vrcp.pop %v1039
      %v1112 = vmul.f32 1.0, %v1111
      %v1113 = vrcp.pop %v1040
      %v1114 = vmul.f32 1.0, %v1113
      %v1115 = vrcp.pop %v1041
      %v1116 = vmul.f32 1.0, %v1115
      %v1117 = vrcp.pop %v1042
      %v1118 = vmul.f32 1.0, %v1117
      %v1119 = vrcp.pop %v1043
      %v1120 = vmul.f32 1.0, %v1119
      %v1121 = vrcp.pop %v1044
      %v1122 = vmul.f32 1.0, %v1121
      %v1123 = vrcp.pop %v1045
      %v1124 = vmul.f32 1.0, %v1123
      %v1125 = vrcp.pop %v1046
      %v1126 = vmul.f32 1.0, %v1125
      %v1127 = vrcp.pop %v1047
      %v1128 = vmul.f32 1.0, %v1127
      %v1129 = vrcp.pop %v1048
      %v1130 = vmul.f32 1.0, %v1129
      %v1131 = vrcp.pop %v1049
      %v1132 = vmul.f32 1.0, %v1131
      %v1133 = vrcp.pop %v1050
      %v1134 = vmul.f32 1.0, %v1133
      %v1135 = vrcp.pop %v1051
      %v1136 = vmul.f32 1.0, %v1135
      %v1137 = vrcp.pop %v1052
      %v1138 = vmul.f32 1.0, %v1137
      %v1139 = vrcp.pop %v1053
      %v1140 = vmul.f32 1.0, %v1139
      %v1141 = vrcp.pop %v1054
      %v1142 = vmul.f32 1.0, %v1141
      %v1143 = vrcp.pop %v1055
      %v1144 = vmul.f32 1.0, %v1143
      %v1145 = vrcp.pop %v1056
      %v1146 = vmul.f32 1.0, %v1145
      %v1147 = vrcp.pop %v1057
      %v1148 = vmul.f32 1.0, %v1147
      %v1149 = vrcp.pop %v1058
      %v1150 = vmul.f32 1.0, %v1149
      %v1151 = vrcp.pop %v1059
      %v1152 = vmul.f32 1.0, %v1151
      %v1153 = vrcp.pop %v1060
      %v1154 = vmul.f32 1.0, %v1153
      %v1155 = vrcp.pop %v1061
      %v1156 = vmul.f32 1.0, %v1155
      %v1157 = vrcp.pop %v1062
      %v1158 = vmul.f32 1.0, %v1157
      %v1159 = vmul.f32 %v329, %v1064
      %v1160 = vmul.f32 %v330, %v1066
      %v1161 = vmul.f32 %v331, %v1068
      %v1162 = vmul.f32 %v332, %v1070
      %v1163 = vmul.f32 %v333, %v1072
      %v1164 = vmul.f32 %v334, %v1074
      %v1165 = vmul.f32 %v335, %v1076
      %v1166 = vmul.f32 %v336, %v1078
      %v1167 = vmul.f32 %v337, %v1080
      %v1168 = vmul.f32 %v338, %v1082
      %v1169 = vmul.f32 %v339, %v1084
      %v1170 = vmul.f32 %v340, %v1086
      %v1171 = vmul.f32 %v341, %v1088
      %v1172 = vmul.f32 %v342, %v1090
      %v1173 = vmul.f32 %v343, %v1092
      %v1174 = vmul.f32 %v344, %v1094
      %v1175 = vadd.f32 %v1159, %v1167
      %v1176 = vadd.f32 %v1160, %v1168
      %v1177 = vadd.f32 %v1161, %v1169
      %v1178 = vadd.f32 %v1162, %v1170
      %v1179 = vadd.f32 %v1163, %v1171
      %v1180 = vadd.f32 %v1164, %v1172
      %v1181 = vadd.f32 %v1165, %v1173
      %v1182 = vadd.f32 %v1166, %v1174
      %v1183 = vmul.f32 %v321, %v1096
      %v1184 = vmul.f32 %v322, %v1098
      %v1185 = vmul.f32 %v323, %v1100
      %v1186 = vmul.f32 %v324, %v1102
      %v1187 = vmul.f32 %v325, %v1104
      %v1188 = vmul.f32 %v326, %v1106
      %v1189 = vmul.f32 %v327, %v1108
      %v1190 = vmul.f32 %v328, %v1110
      %v1191 = vmul.f32 %v337, %v1112
      %v1192 = vmul.f32 %v338, %v1114
      %v1193 = vmul.f32 %v339, %v1116
      %v1194 = vmul.f32 %v340, %v1118
      %v1195 = vmul.f32 %v341, %v1120
      %v1196 = vmul.f32 %v342, %v1122
      %v1197 = vmul.f32 %v343, %v1124
      %v1198 = vmul.f32 %v344, %v1126
      %v1199 = vadd.f32 %v1183, %v1191
      %v1200 = vadd.f32 %v1184, %v1192
      %v1201 = vadd.f32 %v1185, %v1193
      %v1202 = vadd.f32 %v1186, %v1194
      %v1203 = vadd.f32 %v1187, %v1195
      %v1204 = vadd.f32 %v1188, %v1196
      %v1205 = vadd.f32 %v1189, %v1197
      %v1206 = vadd.f32 %v1190, %v1198
      %v1207 = vmul.f32 %v321, %v1128
      %v1208 = vmul.f32 %v322, %v1130
      %v1209 = vmul.f32 %v323, %v1132
      %v1210 = vmul.f32 %v324, %v1134
      %v1211 = vmul.f32 %v325, %v1136
      %v1212 = vmul.f32 %v326, %v1138
      %v1213 = vmul.f32 %v327, %v1140
      %v1214 = vmul.f32 %v328, %v1142
      %v1215 = vmul.f32 %v329, %v1144
      %v1216 = vmul.f32 %v330, %v1146
      %v1217 = vmul.f32 %v331, %v1148
      %v1218 = vmul.f32 %v332, %v1150
      %v1219 = vmul.f32 %v333, %v1152
      %v1220 = vmul.f32 %v334, %v1154
      %v1221 = vmul.f32 %v335, %v1156
      %v1222 = vmul.f32 %v336, %v1158
      %v1223 = vadd.f32 %v1207, %v1215
      %v1224 = vadd.f32 %v1208, %v1216
      %v1225 = vadd.f32 %v1209, %v1217
      %v1226 = vadd.f32 %v1210, %v1218
      %v1227 = vadd.f32 %v1211, %v1219
      %v1228 = vadd.f32 %v1212, %v1220
      %v1229 = vadd.f32 %v1213, %v1221
      %v1230 = vadd.f32 %v1214, %v1222
      %v1231 = vld [vmem:[%s2] sm:$0xf]
      %v1232 = vld [vmem:[%s2 + $0x4] sm:$0xf]
      %v1233 = vld [vmem:[%s2 + $0x8] sm:$0xf]
      %v1234 = vld [vmem:[%s2 + $0xc] sm:$0xf]
      %v1235 = vld [vmem:[%s2 + $0x10] sm:$0xf]
      %v1236 = vld [vmem:[%s2 + $0x14] sm:$0xf]
      %v1237 = vld [vmem:[%s2 + $0x18] sm:$0xf]
      %v1238 = vld [vmem:[%s2 + $0x1c] sm:$0xf]
      %v1239 = vld [vmem:[%s2 + $0x20] sm:$0xf]
      %v1240 = vld [vmem:[%s2 + $0x24] sm:$0xf]
      %v1241 = vld [vmem:[%s2 + $0x28] sm:$0xf]
      %v1242 = vld [vmem:[%s2 + $0x2c] sm:$0xf]
      %v1243 = vld [vmem:[%s2 + $0x30] sm:$0xf]
      %v1244 = vld [vmem:[%s2 + $0x34] sm:$0xf]
      %v1245 = vld [vmem:[%s2 + $0x38] sm:$0xf]
      %v1246 = vld [vmem:[%s2 + $0x3c] sm:$0xf]
      %v1247 = vld [vmem:[%s2 + $0x40] sm:$0xf]
      %v1248 = vld [vmem:[%s2 + $0x44] sm:$0xf]
      %v1249 = vld [vmem:[%s2 + $0x48] sm:$0xf]
      %v1250 = vld [vmem:[%s2 + $0x4c] sm:$0xf]
      %v1251 = vld [vmem:[%s2 + $0x50] sm:$0xf]
      %v1252 = vld [vmem:[%s2 + $0x54] sm:$0xf]
      %v1253 = vld [vmem:[%s2 + $0x58] sm:$0xf]
      %v1254 = vld [vmem:[%s2 + $0x5c] sm:$0xf]
      %v1255 = vld [vmem:[%s2 + $0x60] sm:$0xf]
      %v1256 = vld [vmem:[%s2 + $0x64] sm:$0xf]
      %v1257 = vld [vmem:[%s2 + $0x68] sm:$0xf]
      %v1258 = vld [vmem:[%s2 + $0x6c] sm:$0xf]
      %v1259 = vld [vmem:[%s2 + $0x70] sm:$0xf]
      %v1260 = vld [vmem:[%s2 + $0x74] sm:$0xf]
      %v1261 = vld [vmem:[%s2 + $0x78] sm:$0xf]
      %v1262 = vld [vmem:[%s2 + $0x7c] sm:$0xf]
      %v1263 = vld [vmem:[%s2 + $0x80] sm:$0xf]
      %v1264 = vld [vmem:[%s2 + $0x84] sm:$0xf]
      %v1265 = vld [vmem:[%s2 + $0x88] sm:$0xf]
      %v1266 = vld [vmem:[%s2 + $0x8c] sm:$0xf]
      %v1267 = vpack.c.bf16 %v1177, %v1175
      %v1268 = vpack.c.bf16 %v1178, %v1176
      %v1269 = vpack.c.bf16 %v1181, %v1179
      %v1270 = vpack.c.bf16 %v1182, %v1180
      %v1271 = vpack.c.bf16 %v1201, %v1199
      %v1272 = vpack.c.bf16 %v1202, %v1200
      %v1273 = vpack.c.bf16 %v1205, %v1203
      %v1274 = vpack.c.bf16 %v1206, %v1204
      %v1275 = vpack.c.bf16 %v1225, %v1223
      %v1276 = vpack.c.bf16 %v1226, %v1224
      %v1277 = vpack.c.bf16 %v1229, %v1227
      %v1278 = vpack.c.bf16 %v1230, %v1228
      %v1315 = vunpack.c.l.b16 %v1231
      %v1316 = vunpack.c.l.b16 %v1232
      %v1317 = vunpack.c.l.b16 %v1233
      %v1318 = vunpack.c.l.b16 %v1234
      %v1319 = vunpack.c.l.b16 %v1235
      %v1320 = vunpack.c.l.b16 %v1236
      %v1321 = vunpack.c.l.b16 %v1237
      %v1322 = vunpack.c.l.b16 %v1238
      %v1323 = vunpack.c.l.b16 %v1239
      %v1324 = vunpack.c.l.b16 %v1240
      %v1325 = vunpack.c.l.b16 %v1241
      %v1326 = vunpack.c.l.b16 %v1242
      %v1327 = vunpack.c.l.b16 %v1243
      %v1328 = vunpack.c.l.b16 %v1244
      %v1329 = vunpack.c.l.b16 %v1245
      %v1330 = vunpack.c.l.b16 %v1246
      %v1331 = vunpack.c.l.b16 %v1247
      %v1332 = vunpack.c.l.b16 %v1248
      %v1333 = vunpack.c.l.b16 %v1249
      %v1334 = vunpack.c.l.b16 %v1250
      %v1335 = vunpack.c.l.b16 %v1251
      %v1336 = vunpack.c.l.b16 %v1252
      %v1337 = vunpack.c.l.b16 %v1253
      %v1338 = vunpack.c.l.b16 %v1254
      %v1339 = vunpack.c.l.b16 %v1255
      %v1340 = vunpack.c.l.b16 %v1256
      %v1341 = vunpack.c.l.b16 %v1257
      %v1342 = vunpack.c.l.b16 %v1258
      %v1343 = vunpack.c.l.b16 %v1259
      %v1344 = vunpack.c.l.b16 %v1260
      %v1345 = vunpack.c.l.b16 %v1261
      %v1346 = vunpack.c.l.b16 %v1262
      %v1347 = vunpack.c.l.b16 %v1263
      %v1348 = vunpack.c.l.b16 %v1264
      %v1349 = vunpack.c.l.b16 %v1265
      %v1350 = vunpack.c.l.b16 %v1266
      %v1351 = vpack.c.b16 %v1316, %v1315
      %v1352 = vpack.c.b16 %v1318, %v1317
      %v1353 = vpack.c.b16 %v1320, %v1319
      %v1354 = vpack.c.b16 %v1322, %v1321
      %v1355 = vpack.c.b16 %v1324, %v1323
      %v1356 = vpack.c.b16 %v1326, %v1325
      %v1357 = vpack.c.b16 %v1328, %v1327
      %v1358 = vpack.c.b16 %v1330, %v1329
      %v1359 = vpack.c.b16 %v1332, %v1331
      %v1360 = vpack.c.b16 %v1334, %v1333
      %v1361 = vpack.c.b16 %v1336, %v1335
      %v1362 = vpack.c.b16 %v1338, %v1337
      %v1363 = vpack.c.b16 %v1340, %v1339
      %v1364 = vpack.c.b16 %v1342, %v1341
      %v1365 = vpack.c.b16 %v1344, %v1343
      %v1366 = vpack.c.b16 %v1346, %v1345
      %v1367 = vpack.c.b16 %v1348, %v1347
      %v1368 = vpack.c.b16 %v1350, %v1349
      %v1370 = vsel %vm525, %v1351, 0
      %v1373 = vsel %vm525, %v1352, 0
      %v1376 = vsel %vm525, %v1353, 0
      %v1379 = vsel %vm525, %v1354, 0
      %v1382 = vsel %vm525, %v1355, 0
      %v1385 = vsel %vm525, %v1356, 0
      %v1388 = vsel %vm525, %v1357, 0
      %v1391 = vsel %vm525, %v1358, 0
      %v1394 = vsel %vm525, %v1359, 0
      %v1397 = vsel %vm525, %v1360, 0
      %v1400 = vsel %vm525, %v1361, 0
      %v1403 = vsel %vm525, %v1362, 0
      %v1406 = vsel %vm525, %v1363, 0
      %v1409 = vsel %vm525, %v1364, 0
      %v1412 = vsel %vm525, %v1365, 0
      %v1415 = vsel %vm525, %v1366, 0
      %v1418 = vsel %vm525, %v1367, 0
      %v1421 = vsel %vm525, %v1368, 0
      %1423 = vmatprep.subr.bf16.mxu0 0
      %1424 = vmatpush1.bf16.msra.mxu0 0
      %1425 = vmatprep.subr.bf16.mxu0 0
      %1426 = vmatpush1.bf16.msra.mxu0 0
      %1427 = vmatprep.subr.bf16.mxu0 %v1278
      %1428 = vmatpush1.bf16.msra.mxu0 %v1277
      %1429 = vmatprep.subr.bf16.mxu0 %v1276
      %1430 = vmatpush1.bf16.msra.mxu0 %v1275
      %1431 = vmatprep.subr.bf16.mxu0 %v1274
      %1432 = vmatpush1.bf16.msra.mxu0 %v1273
      %1433 = vmatprep.subr.bf16.mxu0 %v1272
      %1434 = vmatpush1.bf16.msra.mxu0 %v1271
      %1435 = vmatprep.subr.bf16.mxu0 %v1270
      %1436 = vmatpush1.bf16.msra.mxu0 %v1269
      %1437 = vmatprep.subr.bf16.mxu0 %v1268
      %1438 = vmatpush1.bf16.msra.mxu0 %v1267
      %1439 = vmatprep.subr.bf16.mxu0 0
      %1440 = vmatpush2.bf16.msra.mxu0 0
      %1441 = vmatprep.subr.bf16.mxu0 0
      %1442 = vmatpush2.bf16.msra.mxu0 0
      %1443 = vmatprep.subr.bf16.mxu0 0
      %1444 = vmatpush2.bf16.msra.mxu0 0
      %1445 = vmatprep.subr.bf16.mxu0 0
      %1446 = vmatpush2.bf16.msra.mxu0 0
      %1447 = vmatprep.subr.bf16.mxu0 0
      %1448 = vmatpush2.bf16.msra.mxu0 0
      %1449 = vmatprep.subr.bf16.mxu0 0
      %1450 = vmatpush2.bf16.msra.mxu0 0
      %1451 = vmatprep.subr.bf16.mxu0 0
      %1452 = vmatpush2.bf16.msra.mxu0 0
      %1453 = vmatprep.subr.bf16.mxu0 0
      %1454 = vmatpush2.bf16.msra.mxu0 0
      %1455 = vmatprep.mubr.bf16.mxu0 0
      %1456 = vmatmul.mubr.bf16.gmra.mxu0 %v1370
      %v1457 = vpop.f32.mrf.mxu0
      %v1458 = vadd.f32 0.0, %v1457
      %v1459 = vpop.f32.mrf.mxu0
      %v1460 = vadd.f32 0.0, %v1459
      %v1461 = vpop.f32.mrf.mxu0
      %v1462 = vadd.f32 0.0, %v1461
      %v1463 = vpop.f32.mrf.mxu0
      %v1464 = vadd.f32 0.0, %v1463
      %1465 = vmatprep.mubr.bf16.mxu0 0
      %1466 = vmatmul.mubr.bf16.gmra.mxu0 %v1373
      %v1467 = vpop.f32.mrf.mxu0
      %v1468 = vadd.f32 0.0, %v1467
      %v1469 = vpop.f32.mrf.mxu0
      %v1470 = vadd.f32 0.0, %v1469
      %v1471 = vpop.f32.mrf.mxu0
      %v1472 = vadd.f32 0.0, %v1471
      %v1473 = vpop.f32.mrf.mxu0
      %v1474 = vadd.f32 0.0, %v1473
      %1475 = vmatprep.mubr.bf16.mxu0 0
      %1476 = vmatmul.mubr.bf16.gmra.mxu0 %v1376
      %v1477 = vpop.f32.mrf.mxu0
      %v1478 = vadd.f32 0.0, %v1477
      %v1479 = vpop.f32.mrf.mxu0
      %v1480 = vadd.f32 0.0, %v1479
      %v1481 = vpop.f32.mrf.mxu0
      %v1482 = vadd.f32 0.0, %v1481
      %v1483 = vpop.f32.mrf.mxu0
      %v1484 = vadd.f32 0.0, %v1483
      %1485 = vmatprep.mubr.bf16.mxu0 0
      %1486 = vmatmul.mubr.bf16.gmra.mxu0 %v1379
      %v1487 = vpop.f32.mrf.mxu0
      %v1488 = vadd.f32 0.0, %v1487
      %v1489 = vpop.f32.mrf.mxu0
      %v1490 = vadd.f32 0.0, %v1489
      %v1491 = vpop.f32.mrf.mxu0
      %v1492 = vadd.f32 0.0, %v1491
      %v1493 = vpop.f32.mrf.mxu0
      %v1494 = vadd.f32 0.0, %v1493
      %1495 = vmatprep.mubr.bf16.mxu0 0
      %1496 = vmatmul.mubr.bf16.gmra.mxu0 %v1382
      %v1497 = vpop.f32.mrf.mxu0
      %v1498 = vadd.f32 0.0, %v1497
      %v1499 = vpop.f32.mrf.mxu0
      %v1500 = vadd.f32 0.0, %v1499
      %v1501 = vpop.f32.mrf.mxu0
      %v1502 = vadd.f32 0.0, %v1501
      %v1503 = vpop.f32.mrf.mxu0
      %v1504 = vadd.f32 0.0, %v1503
      %1505 = vmatprep.mubr.bf16.mxu0 0
      %1506 = vmatmul.mubr.bf16.gmra.mxu0 %v1385
      %v1507 = vpop.f32.mrf.mxu0
      %v1508 = vadd.f32 0.0, %v1507
      %v1509 = vpop.f32.mrf.mxu0
      %v1510 = vadd.f32 0.0, %v1509
      %v1511 = vpop.f32.mrf.mxu0
      %v1512 = vadd.f32 0.0, %v1511
      %v1513 = vpop.f32.mrf.mxu0
      %v1514 = vadd.f32 0.0, %v1513
      %1515 = vmatprep.mubr.bf16.mxu0 0
      %1516 = vmatmul.mubr.bf16.gmra.mxu0 %v1388
      %v1517 = vpop.f32.mrf.mxu0
      %v1518 = vadd.f32 0.0, %v1517
      %v1519 = vpop.f32.mrf.mxu0
      %v1520 = vadd.f32 0.0, %v1519
      %v1521 = vpop.f32.mrf.mxu0
      %v1522 = vadd.f32 0.0, %v1521
      %v1523 = vpop.f32.mrf.mxu0
      %v1524 = vadd.f32 0.0, %v1523
      %1525 = vmatprep.mubr.bf16.mxu0 0
      %1526 = vmatmul.mubr.bf16.gmra.mxu0 %v1391
      %v1527 = vpop.f32.mrf.mxu0
      %v1528 = vadd.f32 0.0, %v1527
      %v1529 = vpop.f32.mrf.mxu0
      %v1530 = vadd.f32 0.0, %v1529
      %v1531 = vpop.f32.mrf.mxu0
      %v1532 = vadd.f32 0.0, %v1531
      %v1533 = vpop.f32.mrf.mxu0
      %v1534 = vadd.f32 0.0, %v1533
      %1535 = vmatprep.mubr.bf16.mxu0 0
      %1536 = vmatmul.mubr.bf16.gmra.mxu0 %v1394
      %v1537 = vpop.f32.mrf.mxu0
      %v1538 = vadd.f32 0.0, %v1537
      %v1539 = vpop.f32.mrf.mxu0
      %v1540 = vadd.f32 0.0, %v1539
      %v1541 = vpop.f32.mrf.mxu0
      %v1542 = vadd.f32 0.0, %v1541
      %v1543 = vpop.f32.mrf.mxu0
      %v1544 = vadd.f32 0.0, %v1543
      %1545 = vmatprep.mubr.bf16.mxu0 0
      %1546 = vmatmul.mubr.bf16.gmra.mxu0 %v1397
      %v1547 = vpop.f32.mrf.mxu0
      %v1548 = vadd.f32 0.0, %v1547
      %v1549 = vpop.f32.mrf.mxu0
      %v1550 = vadd.f32 0.0, %v1549
      %v1551 = vpop.f32.mrf.mxu0
      %v1552 = vadd.f32 0.0, %v1551
      %v1553 = vpop.f32.mrf.mxu0
      %v1554 = vadd.f32 0.0, %v1553
      %1555 = vmatprep.mubr.bf16.mxu0 0
      %1556 = vmatmul.mubr.bf16.gmra.mxu0 %v1400
      %v1557 = vpop.f32.mrf.mxu0
      %v1558 = vadd.f32 0.0, %v1557
      %v1559 = vpop.f32.mrf.mxu0
      %v1560 = vadd.f32 0.0, %v1559
      %v1561 = vpop.f32.mrf.mxu0
      %v1562 = vadd.f32 0.0, %v1561
      %v1563 = vpop.f32.mrf.mxu0
      %v1564 = vadd.f32 0.0, %v1563
      %1565 = vmatprep.mubr.bf16.mxu0 0
      %1566 = vmatmul.mubr.bf16.gmra.mxu0 %v1403
      %v1567 = vpop.f32.mrf.mxu0
      %v1568 = vadd.f32 0.0, %v1567
      %v1569 = vpop.f32.mrf.mxu0
      %v1570 = vadd.f32 0.0, %v1569
      %v1571 = vpop.f32.mrf.mxu0
      %v1572 = vadd.f32 0.0, %v1571
      %v1573 = vpop.f32.mrf.mxu0
      %v1574 = vadd.f32 0.0, %v1573
      %1575 = vmatprep.mubr.bf16.mxu0 0
      %1576 = vmatmul.mubr.bf16.gmra.mxu0 %v1406
      %v1577 = vpop.f32.mrf.mxu0
      %v1578 = vadd.f32 0.0, %v1577
      %v1579 = vpop.f32.mrf.mxu0
      %v1580 = vadd.f32 0.0, %v1579
      %v1581 = vpop.f32.mrf.mxu0
      %v1582 = vadd.f32 0.0, %v1581
      %v1583 = vpop.f32.mrf.mxu0
      %v1584 = vadd.f32 0.0, %v1583
      %1585 = vmatprep.mubr.bf16.mxu0 0
      %1586 = vmatmul.mubr.bf16.gmra.mxu0 %v1409
      %v1587 = vpop.f32.mrf.mxu0
      %v1588 = vadd.f32 0.0, %v1587
      %v1589 = vpop.f32.mrf.mxu0
      %v1590 = vadd.f32 0.0, %v1589
      %v1591 = vpop.f32.mrf.mxu0
      %v1592 = vadd.f32 0.0, %v1591
      %v1593 = vpop.f32.mrf.mxu0
      %v1594 = vadd.f32 0.0, %v1593
      %1595 = vmatprep.mubr.bf16.mxu0 0
      %1596 = vmatmul.mubr.bf16.gmra.mxu0 %v1412
      %v1597 = vpop.f32.mrf.mxu0
      %v1598 = vadd.f32 0.0, %v1597
      %v1599 = vpop.f32.mrf.mxu0
      %v1600 = vadd.f32 0.0, %v1599
      %v1601 = vpop.f32.mrf.mxu0
      %v1602 = vadd.f32 0.0, %v1601
      %v1603 = vpop.f32.mrf.mxu0
      %v1604 = vadd.f32 0.0, %v1603
      %1605 = vmatprep.mubr.bf16.mxu0 0
      %1606 = vmatmul.mubr.bf16.gmra.mxu0 %v1415
      %v1607 = vpop.f32.mrf.mxu0
      %v1608 = vadd.f32 0.0, %v1607
      %v1609 = vpop.f32.mrf.mxu0
      %v1610 = vadd.f32 0.0, %v1609
      %v1611 = vpop.f32.mrf.mxu0
      %v1612 = vadd.f32 0.0, %v1611
      %v1613 = vpop.f32.mrf.mxu0
      %v1614 = vadd.f32 0.0, %v1613
      %1615 = vmatprep.mubr.bf16.mxu0 0
      %1616 = vmatmul.mubr.bf16.gmra.mxu0 %v1418
      %v1617 = vpop.f32.mrf.mxu0
      %v1618 = vadd.f32 0.0, %v1617
      %v1619 = vpop.f32.mrf.mxu0
      %v1620 = vadd.f32 0.0, %v1619
      %v1621 = vpop.f32.mrf.mxu0
      %v1622 = vadd.f32 0.0, %v1621
      %v1623 = vpop.f32.mrf.mxu0
      %v1624 = vadd.f32 0.0, %v1623
      %1625 = vmatprep.mubr.bf16.mxu0 0
      %1626 = vmatmul.mubr.bf16.gmra.mxu0 %v1421
      %v1627 = vpop.f32.mrf.mxu0
      %v1628 = vadd.f32 0.0, %v1627
      %v1629 = vpop.f32.mrf.mxu0
      %v1630 = vadd.f32 0.0, %v1629
      %v1631 = vpop.f32.mrf.mxu0
      %v1632 = vadd.f32 0.0, %v1631
      %v1633 = vpop.f32.mrf.mxu0
      %v1634 = vadd.f32 0.0, %v1633
      %1635 = vdwg.mxu0
      %v1636 = vadd.f32 %v1458, %v753
      %v1637 = vadd.f32 %v1460, %v755
      %v1638 = vadd.f32 %v1462, %v757
      %v1639 = vadd.f32 %v1464, %v759
      %v1640 = vadd.f32 %v1468, %v763
      %v1641 = vadd.f32 %v1470, %v765
      %v1642 = vadd.f32 %v1472, %v767
      %v1643 = vadd.f32 %v1474, %v769
      %v1644 = vadd.f32 %v1478, %v773
      %v1645 = vadd.f32 %v1480, %v775
      %v1646 = vadd.f32 %v1482, %v777
      %v1647 = vadd.f32 %v1484, %v779
      %v1648 = vadd.f32 %v1488, %v783
      %v1649 = vadd.f32 %v1490, %v785
      %v1650 = vadd.f32 %v1492, %v787
      %v1651 = vadd.f32 %v1494, %v789
      %v1652 = vadd.f32 %v1498, %v793
      %v1653 = vadd.f32 %v1500, %v795
      %v1654 = vadd.f32 %v1502, %v797
      %v1655 = vadd.f32 %v1504, %v799
      %v1656 = vadd.f32 %v1508, %v803
      %v1657 = vadd.f32 %v1510, %v805
      %v1658 = vadd.f32 %v1512, %v807
      %v1659 = vadd.f32 %v1514, %v809
      %v1660 = vadd.f32 %v1518, %v813
      %v1661 = vadd.f32 %v1520, %v815
      %v1662 = vadd.f32 %v1522, %v817
      %v1663 = vadd.f32 %v1524, %v819
      %v1664 = vadd.f32 %v1528, %v823
      %v1665 = vadd.f32 %v1530, %v825
      %v1666 = vadd.f32 %v1532, %v827
      %v1667 = vadd.f32 %v1534, %v829
      %v1668 = vadd.f32 %v1538, %v833
      %v1669 = vadd.f32 %v1540, %v835
      %v1670 = vadd.f32 %v1542, %v837
      %v1671 = vadd.f32 %v1544, %v839
      %v1672 = vadd.f32 %v1548, %v843
      %v1673 = vadd.f32 %v1550, %v845
      %v1674 = vadd.f32 %v1552, %v847
      %v1675 = vadd.f32 %v1554, %v849
      %v1676 = vadd.f32 %v1558, %v853
      %v1677 = vadd.f32 %v1560, %v855
      %v1678 = vadd.f32 %v1562, %v857
      %v1679 = vadd.f32 %v1564, %v859
      %v1680 = vadd.f32 %v1568, %v863
      %v1681 = vadd.f32 %v1570, %v865
      %v1682 = vadd.f32 %v1572, %v867
      %v1683 = vadd.f32 %v1574, %v869
      %v1684 = vld [vmem:[%s4] sm:$0xff]
      %v1685 = vld [vmem:[%s4 + $0x8] sm:$0xff]
      %v1686 = vld [vmem:[%s4 + $0x10] sm:$0xff]
      %v1687 = vld [vmem:[%s4 + $0x18] sm:$0xff]
      %v1688 = vld [vmem:[%s4 + $0x20] sm:$0xff]
      %v1689 = vld [vmem:[%s4 + $0x28] sm:$0xff]
      %v1690 = vld [vmem:[%s4 + $0x30] sm:$0xff]
      %v1691 = vld [vmem:[%s4 + $0x38] sm:$0xff]
      %v1692 = vld [vmem:[%s4 + $0x40] sm:$0xff]
      %v1693 = vld [vmem:[%s4 + $0x48] sm:$0xff]
      %v1694 = vld [vmem:[%s4 + $0x50] sm:$0xff]
      %v1695 = vld [vmem:[%s4 + $0x58] sm:$0xff]
      %v1696 = vld [vmem:[%s4 + $0x60] sm:$0xff]
      %v1697 = vld [vmem:[%s4 + $0x68] sm:$0xff]
      %v1698 = vld [vmem:[%s4 + $0x70] sm:$0xff]
      %v1699 = vld [vmem:[%s4 + $0x78] sm:$0xff]
      %v1700 = vld [vmem:[%s4 + $0x80] sm:$0xff]
      %v1701 = vld [vmem:[%s4 + $0x88] sm:$0xff]
      %v1702 = vld [vmem:[%s4 + $0x90] sm:$0xff]
      %v1703 = vld [vmem:[%s4 + $0x98] sm:$0xff]
      %v1704 = vld [vmem:[%s4 + $0xa0] sm:$0xff]
      %v1705 = vld [vmem:[%s4 + $0xa8] sm:$0xff]
      %v1706 = vld [vmem:[%s4 + $0xb0] sm:$0xff]
      %v1707 = vld [vmem:[%s4 + $0xb8] sm:$0xff]
      %1709 = vset.pattern.permute.xlu0 0
      %1710 = vperm.xlu0 %1709, %v1684
      %v1711 = vpop.permute.xlu0 %1710
      %1714 = vset.pattern.permute.xlu0 0
      %1715 = vperm.xlu0 %1714, %v1685
      %v1716 = vpop.permute.xlu0 %1715
      %1719 = vset.pattern.permute.xlu0 0
      %1720 = vperm.xlu0 %1719, %v1686
      %v1721 = vpop.permute.xlu0 %1720
      %1724 = vset.pattern.permute.xlu0 0
      %1725 = vperm.xlu0 %1724, %v1687
      %v1726 = vpop.permute.xlu0 %1725
      %1729 = vset.pattern.permute.xlu0 0
      %1730 = vperm.xlu0 %1729, %v1688
      %v1731 = vpop.permute.xlu0 %1730
      %1734 = vset.pattern.permute.xlu0 0
      %1735 = vperm.xlu0 %1734, %v1689
      %v1736 = vpop.permute.xlu0 %1735
      %1739 = vset.pattern.permute.xlu0 0
      %1740 = vperm.xlu0 %1739, %v1690
      %v1741 = vpop.permute.xlu0 %1740
      %1744 = vset.pattern.permute.xlu0 0
      %1745 = vperm.xlu0 %1744, %v1691
      %v1746 = vpop.permute.xlu0 %1745
      %1749 = vset.pattern.permute.xlu0 0
      %1750 = vperm.xlu0 %1749, %v1692
      %v1751 = vpop.permute.xlu0 %1750
      %1754 = vset.pattern.permute.xlu0 0
      %1755 = vperm.xlu0 %1754, %v1693
      %v1756 = vpop.permute.xlu0 %1755
      %1759 = vset.pattern.permute.xlu0 0
      %1760 = vperm.xlu0 %1759, %v1694
      %v1761 = vpop.permute.xlu0 %1760
      %1764 = vset.pattern.permute.xlu0 0
      %1765 = vperm.xlu0 %1764, %v1695
      %v1766 = vpop.permute.xlu0 %1765
      %1769 = vset.pattern.permute.xlu0 0
      %1770 = vperm.xlu0 %1769, %v1696
      %v1771 = vpop.permute.xlu0 %1770
      %1774 = vset.pattern.permute.xlu0 0
      %1775 = vperm.xlu0 %1774, %v1697
      %v1776 = vpop.permute.xlu0 %1775
      %1779 = vset.pattern.permute.xlu0 0
      %1780 = vperm.xlu0 %1779, %v1698
      %v1781 = vpop.permute.xlu0 %1780
      %1784 = vset.pattern.permute.xlu0 0
      %1785 = vperm.xlu0 %1784, %v1699
      %v1786 = vpop.permute.xlu0 %1785
      %1789 = vset.pattern.permute.xlu0 0
      %1790 = vperm.xlu0 %1789, %v1700
      %v1791 = vpop.permute.xlu0 %1790
      %1794 = vset.pattern.permute.xlu0 0
      %1795 = vperm.xlu0 %1794, %v1701
      %v1796 = vpop.permute.xlu0 %1795
      %1799 = vset.pattern.permute.xlu0 0
      %1800 = vperm.xlu0 %1799, %v1702
      %v1801 = vpop.permute.xlu0 %1800
      %1804 = vset.pattern.permute.xlu0 0
      %1805 = vperm.xlu0 %1804, %v1703
      %v1806 = vpop.permute.xlu0 %1805
      %1809 = vset.pattern.permute.xlu0 0
      %1810 = vperm.xlu0 %1809, %v1704
      %v1811 = vpop.permute.xlu0 %1810
      %1814 = vset.pattern.permute.xlu0 0
      %1815 = vperm.xlu0 %1814, %v1705
      %v1816 = vpop.permute.xlu0 %1815
      %1819 = vset.pattern.permute.xlu0 0
      %1820 = vperm.xlu0 %1819, %v1706
      %v1821 = vpop.permute.xlu0 %1820
      %1824 = vset.pattern.permute.xlu0 0
      %1825 = vperm.xlu0 %1824, %v1707
      %v1826 = vpop.permute.xlu0 %1825
      %v1828 = vadd.f32 %v1636, %v1711
      %v1829 = vadd.f32 %v1637, %v1711
      %v1830 = vadd.f32 %v1638, %v1716
      %v1831 = vadd.f32 %v1639, %v1716
      %v1832 = vadd.f32 %v1640, %v1721
      %v1833 = vadd.f32 %v1641, %v1721
      %v1834 = vadd.f32 %v1642, %v1726
      %v1835 = vadd.f32 %v1643, %v1726
      %v1836 = vadd.f32 %v1644, %v1731
      %v1837 = vadd.f32 %v1645, %v1731
      %v1838 = vadd.f32 %v1646, %v1736
      %v1839 = vadd.f32 %v1647, %v1736
      %v1840 = vadd.f32 %v1648, %v1741
      %v1841 = vadd.f32 %v1649, %v1741
      %v1842 = vadd.f32 %v1650, %v1746
      %v1843 = vadd.f32 %v1651, %v1746
      %v1844 = vadd.f32 %v1652, %v1751
      %v1845 = vadd.f32 %v1653, %v1751
      %v1846 = vadd.f32 %v1654, %v1756
      %v1847 = vadd.f32 %v1655, %v1756
      %v1848 = vadd.f32 %v1656, %v1761
      %v1849 = vadd.f32 %v1657, %v1761
      %v1850 = vadd.f32 %v1658, %v1766
      %v1851 = vadd.f32 %v1659, %v1766
      %v1852 = vadd.f32 %v1660, %v1771
      %v1853 = vadd.f32 %v1661, %v1771
      %v1854 = vadd.f32 %v1662, %v1776
      %v1855 = vadd.f32 %v1663, %v1776
      %v1856 = vadd.f32 %v1664, %v1781
      %v1857 = vadd.f32 %v1665, %v1781
      %v1858 = vadd.f32 %v1666, %v1786
      %v1859 = vadd.f32 %v1667, %v1786
      %v1860 = vadd.f32 %v1668, %v1791
      %v1861 = vadd.f32 %v1669, %v1791
      %v1862 = vadd.f32 %v1670, %v1796
      %v1863 = vadd.f32 %v1671, %v1796
      %v1864 = vadd.f32 %v1672, %v1801
      %v1865 = vadd.f32 %v1673, %v1801
      %v1866 = vadd.f32 %v1674, %v1806
      %v1867 = vadd.f32 %v1675, %v1806
      %v1868 = vadd.f32 %v1676, %v1811
      %v1869 = vadd.f32 %v1677, %v1811
      %v1870 = vadd.f32 %v1678, %v1816
      %v1871 = vadd.f32 %v1679, %v1816
      %v1872 = vadd.f32 %v1680, %v1821
      %v1873 = vadd.f32 %v1681, %v1821
      %v1874 = vadd.f32 %v1682, %v1826
      %v1875 = vadd.f32 %v1683, %v1826
      %v1876 = vxor.u32 %v1828, 2147483648
      %v1877 = vxor.u32 %v1829, 2147483648
      %v1878 = vxor.u32 %v1830, 2147483648
      %v1879 = vxor.u32 %v1831, 2147483648
      %v1880 = vxor.u32 %v1832, 2147483648
      %v1881 = vxor.u32 %v1833, 2147483648
      %v1882 = vxor.u32 %v1834, 2147483648
      %v1883 = vxor.u32 %v1835, 2147483648
      %v1884 = vxor.u32 %v1836, 2147483648
      %v1885 = vxor.u32 %v1837, 2147483648
      %v1886 = vxor.u32 %v1838, 2147483648
      %v1887 = vxor.u32 %v1839, 2147483648
      %v1888 = vxor.u32 %v1840, 2147483648
      %v1889 = vxor.u32 %v1841, 2147483648
      %v1890 = vxor.u32 %v1842, 2147483648
      %v1891 = vxor.u32 %v1843, 2147483648
      %v1892 = vxor.u32 %v1844, 2147483648
      %v1893 = vxor.u32 %v1845, 2147483648
      %v1894 = vxor.u32 %v1846, 2147483648
      %v1895 = vxor.u32 %v1847, 2147483648
      %v1896 = vxor.u32 %v1848, 2147483648
      %v1897 = vxor.u32 %v1849, 2147483648
      %v1898 = vxor.u32 %v1850, 2147483648
      %v1899 = vxor.u32 %v1851, 2147483648
      %v1900 = vxor.u32 %v1852, 2147483648
      %v1901 = vxor.u32 %v1853, 2147483648
      %v1902 = vxor.u32 %v1854, 2147483648
      %v1903 = vxor.u32 %v1855, 2147483648
      %v1904 = vxor.u32 %v1856, 2147483648
      %v1905 = vxor.u32 %v1857, 2147483648
      %v1906 = vxor.u32 %v1858, 2147483648
      %v1907 = vxor.u32 %v1859, 2147483648
      %v1908 = vxor.u32 %v1860, 2147483648
      %v1909 = vxor.u32 %v1861, 2147483648
      %v1910 = vxor.u32 %v1862, 2147483648
      %v1911 = vxor.u32 %v1863, 2147483648
      %v1912 = vxor.u32 %v1864, 2147483648
      %v1913 = vxor.u32 %v1865, 2147483648
      %v1914 = vxor.u32 %v1866, 2147483648
      %v1915 = vxor.u32 %v1867, 2147483648
      %v1916 = vxor.u32 %v1868, 2147483648
      %v1917 = vxor.u32 %v1869, 2147483648
      %v1918 = vxor.u32 %v1870, 2147483648
      %v1919 = vxor.u32 %v1871, 2147483648
      %v1920 = vxor.u32 %v1872, 2147483648
      %v1921 = vxor.u32 %v1873, 2147483648
      %v1922 = vxor.u32 %v1874, 2147483648
      %v1923 = vxor.u32 %v1875, 2147483648
      %v1924 = vmul.f32 %v1876, 1.442695
      %v1925 = vpow.pop %v1924
      %v1926 = vmul.f32 %v1877, 1.442695
      %v1927 = vpow.pop %v1926
      %v1928 = vmul.f32 %v1878, 1.442695
      %v1929 = vpow.pop %v1928
      %v1930 = vmul.f32 %v1879, 1.442695
      %v1931 = vpow.pop %v1930
      %v1932 = vmul.f32 %v1880, 1.442695
      %v1933 = vpow.pop %v1932
      %v1934 = vmul.f32 %v1881, 1.442695
      %v1935 = vpow.pop %v1934
      %v1936 = vmul.f32 %v1882, 1.442695
      %v1937 = vpow.pop %v1936
      %v1938 = vmul.f32 %v1883, 1.442695
      %v1939 = vpow.pop %v1938
      %v1940 = vmul.f32 %v1884, 1.442695
      %v1941 = vpow.pop %v1940
      %v1942 = vmul.f32 %v1885, 1.442695
      %v1943 = vpow.pop %v1942
      %v1944 = vmul.f32 %v1886, 1.442695
      %v1945 = vpow.pop %v1944
      %v1946 = vmul.f32 %v1887, 1.442695
      %v1947 = vpow.pop %v1946
      %v1948 = vmul.f32 %v1888, 1.442695
      %v1949 = vpow.pop %v1948
      %v1950 = vmul.f32 %v1889, 1.442695
      %v1951 = vpow.pop %v1950
      %v1952 = vmul.f32 %v1890, 1.442695
      %v1953 = vpow.pop %v1952
      %v1954 = vmul.f32 %v1891, 1.442695
      %v1955 = vpow.pop %v1954
      %v1956 = vmul.f32 %v1892, 1.442695
      %v1957 = vpow.pop %v1956
      %v1958 = vmul.f32 %v1893, 1.442695
      %v1959 = vpow.pop %v1958
      %v1960 = vmul.f32 %v1894, 1.442695
      %v1961 = vpow.pop %v1960
      %v1962 = vmul.f32 %v1895, 1.442695
      %v1963 = vpow.pop %v1962
      %v1964 = vmul.f32 %v1896, 1.442695
      %v1965 = vpow.pop %v1964
      %v1966 = vmul.f32 %v1897, 1.442695
      %v1967 = vpow.pop %v1966
      %v1968 = vmul.f32 %v1898, 1.442695
      %v1969 = vpow.pop %v1968
      %v1970 = vmul.f32 %v1899, 1.442695
      %v1971 = vpow.pop %v1970
      %v1972 = vmul.f32 %v1900, 1.442695
      %v1973 = vpow.pop %v1972
      %v1974 = vmul.f32 %v1901, 1.442695
      %v1975 = vpow.pop %v1974
      %v1976 = vmul.f32 %v1902, 1.442695
      %v1977 = vpow.pop %v1976
      %v1978 = vmul.f32 %v1903, 1.442695
      %v1979 = vpow.pop %v1978
      %v1980 = vmul.f32 %v1904, 1.442695
      %v1981 = vpow.pop %v1980
      %v1982 = vmul.f32 %v1905, 1.442695
      %v1983 = vpow.pop %v1982
      %v1984 = vmul.f32 %v1906, 1.442695
      %v1985 = vpow.pop %v1984
      %v1986 = vmul.f32 %v1907, 1.442695
      %v1987 = vpow.pop %v1986
      %v1988 = vmul.f32 %v1908, 1.442695
      %v1989 = vpow.pop %v1988
      %v1990 = vmul.f32 %v1909, 1.442695
      %v1991 = vpow.pop %v1990
      %v1992 = vmul.f32 %v1910, 1.442695
      %v1993 = vpow.pop %v1992
      %v1994 = vmul.f32 %v1911, 1.442695
      %v1995 = vpow.pop %v1994
      %v1996 = vmul.f32 %v1912, 1.442695
      %v1997 = vpow.pop %v1996
      %v1998 = vmul.f32 %v1913, 1.442695
      %v1999 = vpow.pop %v1998
      %v2000 = vmul.f32 %v1914, 1.442695
      %v2001 = vpow.pop %v2000
      %v2002 = vmul.f32 %v1915, 1.442695
      %v2003 = vpow.pop %v2002
      %v2004 = vmul.f32 %v1916, 1.442695
      %v2005 = vpow.pop %v2004
      %v2006 = vmul.f32 %v1917, 1.442695
      %v2007 = vpow.pop %v2006
      %v2008 = vmul.f32 %v1918, 1.442695
      %v2009 = vpow.pop %v2008
      %v2010 = vmul.f32 %v1919, 1.442695
      %v2011 = vpow.pop %v2010
      %v2012 = vmul.f32 %v1920, 1.442695
      %v2013 = vpow.pop %v2012
      %v2014 = vmul.f32 %v1921, 1.442695
      %v2015 = vpow.pop %v2014
      %v2016 = vmul.f32 %v1922, 1.442695
      %v2017 = vpow.pop %v2016
      %v2018 = vmul.f32 %v1923, 1.442695
      %v2019 = vpow.pop %v2018
      %v2020 = vadd.f32 %v1925, 1.0
      %v2021 = vadd.f32 %v1927, 1.0
      %v2022 = vadd.f32 %v1929, 1.0
      %v2023 = vadd.f32 %v1931, 1.0
      %v2024 = vadd.f32 %v1933, 1.0
      %v2025 = vadd.f32 %v1935, 1.0
      %v2026 = vadd.f32 %v1937, 1.0
      %v2027 = vadd.f32 %v1939, 1.0
      %v2028 = vadd.f32 %v1941, 1.0
      %v2029 = vadd.f32 %v1943, 1.0
      %v2030 = vadd.f32 %v1945, 1.0
      %v2031 = vadd.f32 %v1947, 1.0
      %v2032 = vadd.f32 %v1949, 1.0
      %v2033 = vadd.f32 %v1951, 1.0
      %v2034 = vadd.f32 %v1953, 1.0
      %v2035 = vadd.f32 %v1955, 1.0
      %v2036 = vadd.f32 %v1957, 1.0
      %v2037 = vadd.f32 %v1959, 1.0
      %v2038 = vadd.f32 %v1961, 1.0
      %v2039 = vadd.f32 %v1963, 1.0
      %v2040 = vadd.f32 %v1965, 1.0
      %v2041 = vadd.f32 %v1967, 1.0
      %v2042 = vadd.f32 %v1969, 1.0
      %v2043 = vadd.f32 %v1971, 1.0
      %v2044 = vadd.f32 %v1973, 1.0
      %v2045 = vadd.f32 %v1975, 1.0
      %v2046 = vadd.f32 %v1977, 1.0
      %v2047 = vadd.f32 %v1979, 1.0
      %v2048 = vadd.f32 %v1981, 1.0
      %v2049 = vadd.f32 %v1983, 1.0
      %v2050 = vadd.f32 %v1985, 1.0
      %v2051 = vadd.f32 %v1987, 1.0
      %v2052 = vadd.f32 %v1989, 1.0
      %v2053 = vadd.f32 %v1991, 1.0
      %v2054 = vadd.f32 %v1993, 1.0
      %v2055 = vadd.f32 %v1995, 1.0
      %v2056 = vadd.f32 %v1997, 1.0
      %v2057 = vadd.f32 %v1999, 1.0
      %v2058 = vadd.f32 %v2001, 1.0
      %v2059 = vadd.f32 %v2003, 1.0
      %v2060 = vadd.f32 %v2005, 1.0
      %v2061 = vadd.f32 %v2007, 1.0
      %v2062 = vadd.f32 %v2009, 1.0
      %v2063 = vadd.f32 %v2011, 1.0
      %v2064 = vadd.f32 %v2013, 1.0
      %v2065 = vadd.f32 %v2015, 1.0
      %v2066 = vadd.f32 %v2017, 1.0
      %v2067 = vadd.f32 %v2019, 1.0
      %v2068 = vrcp.pop %v2020
      %v2069 = vmul.f32 1.0, %v2068
      %v2070 = vrcp.pop %v2021
      %v2071 = vmul.f32 1.0, %v2070
      %v2072 = vrcp.pop %v2022
      %v2073 = vmul.f32 1.0, %v2072
      %v2074 = vrcp.pop %v2023
      %v2075 = vmul.f32 1.0, %v2074
      %v2076 = vrcp.pop %v2024
      %v2077 = vmul.f32 1.0, %v2076
      %v2078 = vrcp.pop %v2025
      %v2079 = vmul.f32 1.0, %v2078
      %v2080 = vrcp.pop %v2026
      %v2081 = vmul.f32 1.0, %v2080
      %v2082 = vrcp.pop %v2027
      %v2083 = vmul.f32 1.0, %v2082
      %v2084 = vrcp.pop %v2028
      %v2085 = vmul.f32 1.0, %v2084
      %v2086 = vrcp.pop %v2029
      %v2087 = vmul.f32 1.0, %v2086
      %v2088 = vrcp.pop %v2030
      %v2089 = vmul.f32 1.0, %v2088
      %v2090 = vrcp.pop %v2031
      %v2091 = vmul.f32 1.0, %v2090
      %v2092 = vrcp.pop %v2032
      %v2093 = vmul.f32 1.0, %v2092
      %v2094 = vrcp.pop %v2033
      %v2095 = vmul.f32 1.0, %v2094
      %v2096 = vrcp.pop %v2034
      %v2097 = vmul.f32 1.0, %v2096
      %v2098 = vrcp.pop %v2035
      %v2099 = vmul.f32 1.0, %v2098
      %v2100 = vrcp.pop %v2036
      %v2101 = vmul.f32 1.0, %v2100
      %v2102 = vrcp.pop %v2037
      %v2103 = vmul.f32 1.0, %v2102
      %v2104 = vrcp.pop %v2038
      %v2105 = vmul.f32 1.0, %v2104
      %v2106 = vrcp.pop %v2039
      %v2107 = vmul.f32 1.0, %v2106
      %v2108 = vrcp.pop %v2040
      %v2109 = vmul.f32 1.0, %v2108
      %v2110 = vrcp.pop %v2041
      %v2111 = vmul.f32 1.0, %v2110
      %v2112 = vrcp.pop %v2042
      %v2113 = vmul.f32 1.0, %v2112
      %v2114 = vrcp.pop %v2043
      %v2115 = vmul.f32 1.0, %v2114
      %v2116 = vrcp.pop %v2044
      %v2117 = vmul.f32 1.0, %v2116
      %v2118 = vrcp.pop %v2045
      %v2119 = vmul.f32 1.0, %v2118
      %v2120 = vrcp.pop %v2046
      %v2121 = vmul.f32 1.0, %v2120
      %v2122 = vrcp.pop %v2047
      %v2123 = vmul.f32 1.0, %v2122
      %v2124 = vrcp.pop %v2048
      %v2125 = vmul.f32 1.0, %v2124
      %v2126 = vrcp.pop %v2049
      %v2127 = vmul.f32 1.0, %v2126
      %v2128 = vrcp.pop %v2050
      %v2129 = vmul.f32 1.0, %v2128
      %v2130 = vrcp.pop %v2051
      %v2131 = vmul.f32 1.0, %v2130
      %v2132 = vrcp.pop %v2052
      %v2133 = vmul.f32 1.0, %v2132
      %v2134 = vrcp.pop %v2053
      %v2135 = vmul.f32 1.0, %v2134
      %v2136 = vrcp.pop %v2054
      %v2137 = vmul.f32 1.0, %v2136
      %v2138 = vrcp.pop %v2055
      %v2139 = vmul.f32 1.0, %v2138
      %v2140 = vrcp.pop %v2056
      %v2141 = vmul.f32 1.0, %v2140
      %v2142 = vrcp.pop %v2057
      %v2143 = vmul.f32 1.0, %v2142
      %v2144 = vrcp.pop %v2058
      %v2145 = vmul.f32 1.0, %v2144
      %v2146 = vrcp.pop %v2059
      %v2147 = vmul.f32 1.0, %v2146
      %v2148 = vrcp.pop %v2060
      %v2149 = vmul.f32 1.0, %v2148
      %v2150 = vrcp.pop %v2061
      %v2151 = vmul.f32 1.0, %v2150
      %v2152 = vrcp.pop %v2062
      %v2153 = vmul.f32 1.0, %v2152
      %v2154 = vrcp.pop %v2063
      %v2155 = vmul.f32 1.0, %v2154
      %v2156 = vrcp.pop %v2064
      %v2157 = vmul.f32 1.0, %v2156
      %v2158 = vrcp.pop %v2065
      %v2159 = vmul.f32 1.0, %v2158
      %v2160 = vrcp.pop %v2066
      %v2161 = vmul.f32 1.0, %v2160
      %v2162 = vrcp.pop %v2067
      %v2163 = vmul.f32 1.0, %v2162
      %v2164 = vld [vmem:[%s3] sm:$0xf]
      %v2165 = vld [vmem:[%s3 + $0x4] sm:$0xf]
      %v2166 = vld [vmem:[%s3 + $0x8] sm:$0xf]
      %v2167 = vld [vmem:[%s3 + $0xc] sm:$0xf]
      %v2168 = vld [vmem:[%s3 + $0x10] sm:$0xf]
      %v2169 = vld [vmem:[%s3 + $0x14] sm:$0xf]
      %v2170 = vld [vmem:[%s3 + $0x18] sm:$0xf]
      %v2171 = vld [vmem:[%s3 + $0x1c] sm:$0xf]
      %v2172 = vld [vmem:[%s3 + $0x20] sm:$0xf]
      %v2173 = vld [vmem:[%s3 + $0x24] sm:$0xf]
      %v2174 = vld [vmem:[%s3 + $0x28] sm:$0xf]
      %v2175 = vld [vmem:[%s3 + $0x2c] sm:$0xf]
      %v2176 = vmul.f32 %v321, %v2117
      %v2177 = vmul.f32 %v322, %v2119
      %v2178 = vmul.f32 %v323, %v2121
      %v2179 = vmul.f32 %v324, %v2123
      %v2180 = vmul.f32 %v325, %v2125
      %v2181 = vmul.f32 %v326, %v2127
      %v2182 = vmul.f32 %v327, %v2129
      %v2183 = vmul.f32 %v328, %v2131
      %v2184 = vmul.f32 %v329, %v2133
      %v2185 = vmul.f32 %v330, %v2135
      %v2186 = vmul.f32 %v331, %v2137
      %v2187 = vmul.f32 %v332, %v2139
      %v2188 = vmul.f32 %v333, %v2141
      %v2189 = vmul.f32 %v334, %v2143
      %v2190 = vmul.f32 %v335, %v2145
      %v2191 = vmul.f32 %v336, %v2147
      %v2192 = vmul.f32 %v337, %v2149
      %v2193 = vmul.f32 %v338, %v2151
      %v2194 = vmul.f32 %v339, %v2153
      %v2195 = vmul.f32 %v340, %v2155
      %v2196 = vmul.f32 %v341, %v2157
      %v2197 = vmul.f32 %v342, %v2159
      %v2198 = vmul.f32 %v343, %v2161
      %v2199 = vmul.f32 %v344, %v2163
      %v2200 = vpack.c.bf16 %v2178, %v2176
      %v2201 = vpack.c.bf16 %v2179, %v2177
      %v2202 = vpack.c.bf16 %v2182, %v2180
      %v2203 = vpack.c.bf16 %v2183, %v2181
      %v2204 = vpack.c.bf16 %v2186, %v2184
      %v2205 = vpack.c.bf16 %v2187, %v2185
      %v2206 = vpack.c.bf16 %v2190, %v2188
      %v2207 = vpack.c.bf16 %v2191, %v2189
      %v2208 = vpack.c.bf16 %v2194, %v2192
      %v2209 = vpack.c.bf16 %v2195, %v2193
      %v2210 = vpack.c.bf16 %v2198, %v2196
      %v2211 = vpack.c.bf16 %v2199, %v2197
      %v2224 = vunpack.c.l.b16 %v2164
      %v2225 = vunpack.c.l.b16 %v2165
      %v2226 = vunpack.c.l.b16 %v2166
      %v2227 = vunpack.c.l.b16 %v2167
      %v2228 = vunpack.c.l.b16 %v2168
      %v2229 = vunpack.c.l.b16 %v2169
      %v2230 = vunpack.c.l.b16 %v2170
      %v2231 = vunpack.c.l.b16 %v2171
      %v2232 = vunpack.c.l.b16 %v2172
      %v2233 = vunpack.c.l.b16 %v2173
      %v2234 = vunpack.c.l.b16 %v2174
      %v2235 = vunpack.c.l.b16 %v2175
      %v2236 = vpack.c.b16 %v2225, %v2224
      %v2237 = vpack.c.b16 %v2227, %v2226
      %v2238 = vpack.c.b16 %v2229, %v2228
      %v2239 = vpack.c.b16 %v2231, %v2230
      %v2240 = vpack.c.b16 %v2233, %v2232
      %v2241 = vpack.c.b16 %v2235, %v2234
      %v2243 = vsel %vm525, %v2236, 0
      %v2246 = vsel %vm525, %v2237, 0
      %v2249 = vsel %vm525, %v2238, 0
      %v2252 = vsel %vm525, %v2239, 0
      %v2255 = vsel %vm525, %v2240, 0
      %v2258 = vsel %vm525, %v2241, 0
      %2260 = vmatprep.subr.bf16.mxu0 0
      %2261 = vmatpush1.bf16.msra.mxu0 0
      %2262 = vmatprep.subr.bf16.mxu0 0
      %2263 = vmatpush1.bf16.msra.mxu0 0
      %2264 = vmatprep.subr.bf16.mxu0 %v2211
      %2265 = vmatpush1.bf16.msra.mxu0 %v2210
      %2266 = vmatprep.subr.bf16.mxu0 %v2209
      %2267 = vmatpush1.bf16.msra.mxu0 %v2208
      %2268 = vmatprep.subr.bf16.mxu0 %v2207
      %2269 = vmatpush1.bf16.msra.mxu0 %v2206
      %2270 = vmatprep.subr.bf16.mxu0 %v2205
      %2271 = vmatpush1.bf16.msra.mxu0 %v2204
      %2272 = vmatprep.subr.bf16.mxu0 %v2203
      %2273 = vmatpush1.bf16.msra.mxu0 %v2202
      %2274 = vmatprep.subr.bf16.mxu0 %v2201
      %2275 = vmatpush1.bf16.msra.mxu0 %v2200
      %2276 = vmatprep.subr.bf16.mxu0 0
      %2277 = vmatpush2.bf16.msra.mxu0 0
      %2278 = vmatprep.subr.bf16.mxu0 0
      %2279 = vmatpush2.bf16.msra.mxu0 0
      %2280 = vmatprep.subr.bf16.mxu0 0
      %2281 = vmatpush2.bf16.msra.mxu0 0
      %2282 = vmatprep.subr.bf16.mxu0 0
      %2283 = vmatpush2.bf16.msra.mxu0 0
      %2284 = vmatprep.subr.bf16.mxu0 0
      %2285 = vmatpush2.bf16.msra.mxu0 0
      %2286 = vmatprep.subr.bf16.mxu0 0
      %2287 = vmatpush2.bf16.msra.mxu0 0
      %2288 = vmatprep.subr.bf16.mxu0 0
      %2289 = vmatpush2.bf16.msra.mxu0 0
      %2290 = vmatprep.subr.bf16.mxu0 0
      %2291 = vmatpush2.bf16.msra.mxu0 0
      %2292 = vmatprep.mubr.bf16.mxu0 0
      %2293 = vmatmul.mubr.bf16.gmra.mxu0 %v2243
      %v2294 = vpop.f32.mrf.mxu0
      %v2295 = vadd.f32 0.0, %v2294
      %v2296 = vpop.f32.mrf.mxu0
      %v2297 = vadd.f32 0.0, %v2296
      %v2298 = vpop.f32.mrf.mxu0
      %v2299 = vadd.f32 0.0, %v2298
      %v2300 = vpop.f32.mrf.mxu0
      %v2301 = vadd.f32 0.0, %v2300
      %2302 = vmatprep.mubr.bf16.mxu0 0
      %2303 = vmatmul.mubr.bf16.gmra.mxu0 %v2246
      %v2304 = vpop.f32.mrf.mxu0
      %v2305 = vadd.f32 0.0, %v2304
      %v2306 = vpop.f32.mrf.mxu0
      %v2307 = vadd.f32 0.0, %v2306
      %v2308 = vpop.f32.mrf.mxu0
      %v2309 = vadd.f32 0.0, %v2308
      %v2310 = vpop.f32.mrf.mxu0
      %v2311 = vadd.f32 0.0, %v2310
      %2312 = vmatprep.mubr.bf16.mxu0 0
      %2313 = vmatmul.mubr.bf16.gmra.mxu0 %v2249
      %v2314 = vpop.f32.mrf.mxu0
      %v2315 = vadd.f32 0.0, %v2314
      %v2316 = vpop.f32.mrf.mxu0
      %v2317 = vadd.f32 0.0, %v2316
      %v2318 = vpop.f32.mrf.mxu0
      %v2319 = vadd.f32 0.0, %v2318
      %v2320 = vpop.f32.mrf.mxu0
      %v2321 = vadd.f32 0.0, %v2320
      %2322 = vmatprep.mubr.bf16.mxu0 0
      %2323 = vmatmul.mubr.bf16.gmra.mxu0 %v2252
      %v2324 = vpop.f32.mrf.mxu0
      %v2325 = vadd.f32 0.0, %v2324
      %v2326 = vpop.f32.mrf.mxu0
      %v2327 = vadd.f32 0.0, %v2326
      %v2328 = vpop.f32.mrf.mxu0
      %v2329 = vadd.f32 0.0, %v2328
      %v2330 = vpop.f32.mrf.mxu0
      %v2331 = vadd.f32 0.0, %v2330
      %2332 = vmatprep.mubr.bf16.mxu0 0
      %2333 = vmatmul.mubr.bf16.gmra.mxu0 %v2255
      %v2334 = vpop.f32.mrf.mxu0
      %v2335 = vadd.f32 0.0, %v2334
      %v2336 = vpop.f32.mrf.mxu0
      %v2337 = vadd.f32 0.0, %v2336
      %v2338 = vpop.f32.mrf.mxu0
      %v2339 = vadd.f32 0.0, %v2338
      %v2340 = vpop.f32.mrf.mxu0
      %v2341 = vadd.f32 0.0, %v2340
      %2342 = vmatprep.mubr.bf16.mxu0 0
      %2343 = vmatmul.mubr.bf16.gmra.mxu0 %v2258
      %v2344 = vpop.f32.mrf.mxu0
      %v2345 = vadd.f32 0.0, %v2344
      %v2346 = vpop.f32.mrf.mxu0
      %v2347 = vadd.f32 0.0, %v2346
      %v2348 = vpop.f32.mrf.mxu0
      %v2349 = vadd.f32 0.0, %v2348
      %v2350 = vpop.f32.mrf.mxu0
      %v2351 = vadd.f32 0.0, %v2350
      %2352 = vdwg.mxu0
      %v2353 = vadd.f32 %v1578, %v2295
      %v2354 = vadd.f32 %v1580, %v2297
      %v2355 = vadd.f32 %v1582, %v2299
      %v2356 = vadd.f32 %v1584, %v2301
      %v2357 = vadd.f32 %v1588, %v2305
      %v2358 = vadd.f32 %v1590, %v2307
      %v2359 = vadd.f32 %v1592, %v2309
      %v2360 = vadd.f32 %v1594, %v2311
      %v2361 = vadd.f32 %v1598, %v2315
      %v2362 = vadd.f32 %v1600, %v2317
      %v2363 = vadd.f32 %v1602, %v2319
      %v2364 = vadd.f32 %v1604, %v2321
      %v2365 = vadd.f32 %v1608, %v2325
      %v2366 = vadd.f32 %v1610, %v2327
      %v2367 = vadd.f32 %v1612, %v2329
      %v2368 = vadd.f32 %v1614, %v2331
      %v2369 = vadd.f32 %v1618, %v2335
      %v2370 = vadd.f32 %v1620, %v2337
      %v2371 = vadd.f32 %v1622, %v2339
      %v2372 = vadd.f32 %v1624, %v2341
      %v2373 = vadd.f32 %v1628, %v2345
      %v2374 = vadd.f32 %v1630, %v2347
      %v2375 = vadd.f32 %v1632, %v2349
      %v2376 = vadd.f32 %v1634, %v2351
      %v2377 = vld [vmem:[%s5] sm:$0xff]
      %v2378 = vld [vmem:[%s5 + $0x8] sm:$0xff]
      %v2379 = vld [vmem:[%s5 + $0x10] sm:$0xff]
      %v2380 = vld [vmem:[%s5 + $0x18] sm:$0xff]
      %v2381 = vld [vmem:[%s5 + $0x20] sm:$0xff]
      %v2382 = vld [vmem:[%s5 + $0x28] sm:$0xff]
      %v2383 = vld [vmem:[%s5 + $0x30] sm:$0xff]
      %v2384 = vld [vmem:[%s5 + $0x38] sm:$0xff]
      %v2385 = vld [vmem:[%s5 + $0x40] sm:$0xff]
      %v2386 = vld [vmem:[%s5 + $0x48] sm:$0xff]
      %v2387 = vld [vmem:[%s5 + $0x50] sm:$0xff]
      %v2388 = vld [vmem:[%s5 + $0x58] sm:$0xff]
      %2390 = vset.pattern.permute.xlu0 0
      %2391 = vperm.xlu0 %2390, %v2377
      %v2392 = vpop.permute.xlu0 %2391
      %2395 = vset.pattern.permute.xlu0 0
      %2396 = vperm.xlu0 %2395, %v2378
      %v2397 = vpop.permute.xlu0 %2396
      %2400 = vset.pattern.permute.xlu0 0
      %2401 = vperm.xlu0 %2400, %v2379
      %v2402 = vpop.permute.xlu0 %2401
      %2405 = vset.pattern.permute.xlu0 0
      %2406 = vperm.xlu0 %2405, %v2380
      %v2407 = vpop.permute.xlu0 %2406
      %2410 = vset.pattern.permute.xlu0 0
      %2411 = vperm.xlu0 %2410, %v2381
      %v2412 = vpop.permute.xlu0 %2411
      %2415 = vset.pattern.permute.xlu0 0
      %2416 = vperm.xlu0 %2415, %v2382
      %v2417 = vpop.permute.xlu0 %2416
      %2420 = vset.pattern.permute.xlu0 0
      %2421 = vperm.xlu0 %2420, %v2383
      %v2422 = vpop.permute.xlu0 %2421
      %2425 = vset.pattern.permute.xlu0 0
      %2426 = vperm.xlu0 %2425, %v2384
      %v2427 = vpop.permute.xlu0 %2426
      %2430 = vset.pattern.permute.xlu0 0
      %2431 = vperm.xlu0 %2430, %v2385
      %v2432 = vpop.permute.xlu0 %2431
      %2435 = vset.pattern.permute.xlu0 0
      %2436 = vperm.xlu0 %2435, %v2386
      %v2437 = vpop.permute.xlu0 %2436
      %2440 = vset.pattern.permute.xlu0 0
      %2441 = vperm.xlu0 %2440, %v2387
      %v2442 = vpop.permute.xlu0 %2441
      %2445 = vset.pattern.permute.xlu0 0
      %2446 = vperm.xlu0 %2445, %v2388
      %v2447 = vpop.permute.xlu0 %2446
      %v2449 = vadd.f32 %v2353, %v2392
      %v2450 = vadd.f32 %v2354, %v2392
      %v2451 = vadd.f32 %v2355, %v2397
      %v2452 = vadd.f32 %v2356, %v2397
      %v2453 = vadd.f32 %v2357, %v2402
      %v2454 = vadd.f32 %v2358, %v2402
      %v2455 = vadd.f32 %v2359, %v2407
      %v2456 = vadd.f32 %v2360, %v2407
      %v2457 = vadd.f32 %v2361, %v2412
      %v2458 = vadd.f32 %v2362, %v2412
      %v2459 = vadd.f32 %v2363, %v2417
      %v2460 = vadd.f32 %v2364, %v2417
      %v2461 = vadd.f32 %v2365, %v2422
      %v2462 = vadd.f32 %v2366, %v2422
      %v2463 = vadd.f32 %v2367, %v2427
      %v2464 = vadd.f32 %v2368, %v2427
      %v2465 = vadd.f32 %v2369, %v2432
      %v2466 = vadd.f32 %v2370, %v2432
      %v2467 = vadd.f32 %v2371, %v2437
      %v2468 = vadd.f32 %v2372, %v2437
      %v2469 = vadd.f32 %v2373, %v2442
      %v2470 = vadd.f32 %v2374, %v2442
      %v2471 = vadd.f32 %v2375, %v2447
      %v2472 = vadd.f32 %v2376, %v2447
      %v2473 = vtanh.pop %v2449
      %v2474 = vtanh.pop %v2450
      %v2475 = vtanh.pop %v2451
      %v2476 = vtanh.pop %v2452
      %v2477 = vtanh.pop %v2453
      %v2478 = vtanh.pop %v2454
      %v2479 = vtanh.pop %v2455
      %v2480 = vtanh.pop %v2456
      %v2481 = vtanh.pop %v2457
      %v2482 = vtanh.pop %v2458
      %v2483 = vtanh.pop %v2459
      %v2484 = vtanh.pop %v2460
      %v2485 = vtanh.pop %v2461
      %v2486 = vtanh.pop %v2462
      %v2487 = vtanh.pop %v2463
      %v2488 = vtanh.pop %v2464
      %v2489 = vtanh.pop %v2465
      %v2490 = vtanh.pop %v2466
      %v2491 = vtanh.pop %v2467
      %v2492 = vtanh.pop %v2468
      %v2493 = vtanh.pop %v2469
      %v2494 = vtanh.pop %v2470
      %v2495 = vtanh.pop %v2471
      %v2496 = vtanh.pop %v2472
      %s2497 = sadd.f32 %s320, 1.0
      %v2498 = vstv %s2497
      %v2499 = vmul.f32 %v321, %v2498
      %v2500 = vmul.f32 %v322, %v2498
      %v2501 = vmul.f32 %v323, %v2498
      %v2502 = vmul.f32 %v324, %v2498
      %v2503 = vmul.f32 %v325, %v2498
      %v2504 = vmul.f32 %v326, %v2498
      %v2505 = vmul.f32 %v327, %v2498
      %v2506 = vmul.f32 %v328, %v2498
      %v2507 = vmul.f32 %v329, %v2498
      %v2508 = vmul.f32 %v330, %v2498
      %v2509 = vmul.f32 %v331, %v2498
      %v2510 = vmul.f32 %v332, %v2498
      %v2511 = vmul.f32 %v333, %v2498
      %v2512 = vmul.f32 %v334, %v2498
      %v2513 = vmul.f32 %v335, %v2498
      %v2514 = vmul.f32 %v336, %v2498
      %v2515 = vmul.f32 %v337, %v2498
      %v2516 = vmul.f32 %v338, %v2498
      %v2517 = vmul.f32 %v339, %v2498
      %v2518 = vmul.f32 %v340, %v2498
      %v2519 = vmul.f32 %v341, %v2498
      %v2520 = vmul.f32 %v342, %v2498
      %v2521 = vmul.f32 %v343, %v2498
      %v2522 = vmul.f32 %v344, %v2498
      %v2523 = vsub.f32 %v2473, %v321
      %v2524 = vsub.f32 %v2474, %v322
      %v2525 = vsub.f32 %v2475, %v323
      %v2526 = vsub.f32 %v2476, %v324
      %v2527 = vsub.f32 %v2477, %v325
      %v2528 = vsub.f32 %v2478, %v326
      %v2529 = vsub.f32 %v2479, %v327
      %v2530 = vsub.f32 %v2480, %v328
      %v2531 = vsub.f32 %v2481, %v329
      %v2532 = vsub.f32 %v2482, %v330
      %v2533 = vsub.f32 %v2483, %v331
      %v2534 = vsub.f32 %v2484, %v332
      %v2535 = vsub.f32 %v2485, %v333
      %v2536 = vsub.f32 %v2486, %v334
      %v2537 = vsub.f32 %v2487, %v335
      %v2538 = vsub.f32 %v2488, %v336
      %v2539 = vsub.f32 %v2489, %v337
      %v2540 = vsub.f32 %v2490, %v338
      %v2541 = vsub.f32 %v2491, %v339
      %v2542 = vsub.f32 %v2492, %v340
      %v2543 = vsub.f32 %v2493, %v341
      %v2544 = vsub.f32 %v2494, %v342
      %v2545 = vsub.f32 %v2495, %v343
      %v2546 = vsub.f32 %v2496, %v344
      %v2547 = vmul.f32 %v2069, %v2523
      %v2548 = vmul.f32 %v2071, %v2524
      %v2549 = vmul.f32 %v2073, %v2525
      %v2550 = vmul.f32 %v2075, %v2526
      %v2551 = vmul.f32 %v2077, %v2527
      %v2552 = vmul.f32 %v2079, %v2528
      %v2553 = vmul.f32 %v2081, %v2529
      %v2554 = vmul.f32 %v2083, %v2530
      %v2555 = vmul.f32 %v2085, %v2531
      %v2556 = vmul.f32 %v2087, %v2532
      %v2557 = vmul.f32 %v2089, %v2533
      %v2558 = vmul.f32 %v2091, %v2534
      %v2559 = vmul.f32 %v2093, %v2535
      %v2560 = vmul.f32 %v2095, %v2536
      %v2561 = vmul.f32 %v2097, %v2537
      %v2562 = vmul.f32 %v2099, %v2538
      %v2563 = vmul.f32 %v2101, %v2539
      %v2564 = vmul.f32 %v2103, %v2540
      %v2565 = vmul.f32 %v2105, %v2541
      %v2566 = vmul.f32 %v2107, %v2542
      %v2567 = vmul.f32 %v2109, %v2543
      %v2568 = vmul.f32 %v2111, %v2544
      %v2569 = vmul.f32 %v2113, %v2545
      %v2570 = vmul.f32 %v2115, %v2546
      %v2571 = vstv %s320
      %v2572 = vmul.f32 %v2571, %v2547
      %v2573 = vmul.f32 %v2571, %v2548
      %v2574 = vmul.f32 %v2571, %v2549
      %v2575 = vmul.f32 %v2571, %v2550
      %v2576 = vmul.f32 %v2571, %v2551
      %v2577 = vmul.f32 %v2571, %v2552
      %v2578 = vmul.f32 %v2571, %v2553
      %v2579 = vmul.f32 %v2571, %v2554
      %v2580 = vmul.f32 %v2571, %v2555
      %v2581 = vmul.f32 %v2571, %v2556
      %v2582 = vmul.f32 %v2571, %v2557
      %v2583 = vmul.f32 %v2571, %v2558
      %v2584 = vmul.f32 %v2571, %v2559
      %v2585 = vmul.f32 %v2571, %v2560
      %v2586 = vmul.f32 %v2571, %v2561
      %v2587 = vmul.f32 %v2571, %v2562
      %v2588 = vmul.f32 %v2571, %v2563
      %v2589 = vmul.f32 %v2571, %v2564
      %v2590 = vmul.f32 %v2571, %v2565
      %v2591 = vmul.f32 %v2571, %v2566
      %v2592 = vmul.f32 %v2571, %v2567
      %v2593 = vmul.f32 %v2571, %v2568
      %v2594 = vmul.f32 %v2571, %v2569
      %v2595 = vmul.f32 %v2571, %v2570
      %v2596 = vadd.f32 %v2499, %v2572
      %v2597 = vadd.f32 %v2500, %v2573
      %v2598 = vadd.f32 %v2501, %v2574
      %v2599 = vadd.f32 %v2502, %v2575
      %v2600 = vadd.f32 %v2503, %v2576
      %v2601 = vadd.f32 %v2504, %v2577
      %v2602 = vadd.f32 %v2505, %v2578
      %v2603 = vadd.f32 %v2506, %v2579
      %v2604 = vadd.f32 %v2507, %v2580
      %v2605 = vadd.f32 %v2508, %v2581
      %v2606 = vadd.f32 %v2509, %v2582
      %v2607 = vadd.f32 %v2510, %v2583
      %v2608 = vadd.f32 %v2511, %v2584
      %v2609 = vadd.f32 %v2512, %v2585
      %v2610 = vadd.f32 %v2513, %v2586
      %v2611 = vadd.f32 %v2514, %v2587
      %v2612 = vadd.f32 %v2515, %v2588
      %v2613 = vadd.f32 %v2516, %v2589
      %v2614 = vadd.f32 %v2517, %v2590
      %v2615 = vadd.f32 %v2518, %v2591
      %v2616 = vadd.f32 %v2519, %v2592
      %v2617 = vadd.f32 %v2520, %v2593
      %v2618 = vadd.f32 %v2521, %v2594
      %v2619 = vadd.f32 %v2522, %v2595
      %2620 = vst [vmem:[%s317] sm:$0xff] %v2596
      %2621 = vst [vmem:[%s317 + $0x8] sm:$0xff] %v2597
      %2622 = vst [vmem:[%s317 + $0x10] sm:$0xff] %v2598
      %2623 = vst [vmem:[%s317 + $0x18] sm:$0xff] %v2599
      %2624 = vst [vmem:[%s317 + $0x20] sm:$0xff] %v2600
      %2625 = vst [vmem:[%s317 + $0x28] sm:$0xff] %v2601
      %2626 = vst [vmem:[%s317 + $0x30] sm:$0xff] %v2602
      %2627 = vst [vmem:[%s317 + $0x38] sm:$0xff] %v2603
      %2628 = vst [vmem:[%s317 + $0x40] sm:$0xff] %v2604
      %2629 = vst [vmem:[%s317 + $0x48] sm:$0xff] %v2605
      %2630 = vst [vmem:[%s317 + $0x50] sm:$0xff] %v2606
      %2631 = vst [vmem:[%s317 + $0x58] sm:$0xff] %v2607
      %2632 = vst [vmem:[%s317 + $0x60] sm:$0xff] %v2608
      %2633 = vst [vmem:[%s317 + $0x68] sm:$0xff] %v2609
      %2634 = vst [vmem:[%s317 + $0x70] sm:$0xff] %v2610
      %2635 = vst [vmem:[%s317 + $0x78] sm:$0xff] %v2611
      %2636 = vst [vmem:[%s317 + $0x80] sm:$0xff] %v2612
      %2637 = vst [vmem:[%s317 + $0x88] sm:$0xff] %v2613
      %2638 = vst [vmem:[%s317 + $0x90] sm:$0xff] %v2614
      %2639 = vst [vmem:[%s317 + $0x98] sm:$0xff] %v2615
      %2640 = vst [vmem:[%s317 + $0xa0] sm:$0xff] %v2616
      %2641 = vst [vmem:[%s317 + $0xa8] sm:$0xff] %v2617
      %2642 = vst [vmem:[%s317 + $0xb0] sm:$0xff] %v2618
      %2643 = vst [vmem:[%s317 + $0xb8] sm:$0xff] %v2619
      %s2644 = smul.u32 2, %s24
      %p2645 = scmp.lt.s32.totalorder %s23, 1
      %s2646 = scalar_select %p2645, %s23, 1
      %p2647 = scmp.lt.s32.totalorder %s2644, 1
      %s2648 = scalar_select %p2647, %s2644, 1
      %s2649 = smul.addr %s2646, 24
      %s2650 = sadd.s32 %s2648, %s2649
      %s2651 = smul.addr %s2650, 8
      %s2652 = scalar_lea.vmem %s7, %s2651
      // Predicated region
      $region49: #{graph_model_pallas.1} parent=47 // pred_check
        %p2653 = pneg %p205
      $region50: #{graph_model_pallas.1} parent=47 // pred_check_branch
        %2655 = sbr.rel (%p2653) target = $region52
      $region51: #{graph_model_pallas.1} parent=47 // pred_region
        %s2656 = smul.u32 2, %s24
      $region52: #{graph_model_pallas.1} parent=47 // pred_fallthru
        _
    $region48: #{graph_model_pallas.1} parent=5 // pred_fallthru
      _
    %p2657 = scmp.le.s32.totalorder 2, %s14
    // Predicated region
    $region53: #{graph_model_pallas.1} parent=5 // pred_check
      %p2658 = pneg %p2657
    $region54: #{graph_model_pallas.1} parent=5 // pred_check_branch
      %2660 = sbr.rel (%p2658) target = $region56
    $region55: #{graph_model_pallas.1} parent=5 // pred_region
      %s2661 = ssub.s32 %s14, 2
      // Predicated region
      $region57: #{graph_model_pallas.1} parent=55 // pred_check
        %p2662 = pneg %p211
      $region58: #{graph_model_pallas.1} parent=55 // pred_check_branch
        %2664 = sbr.rel (%p2662) target = $region60
      $region59: #{graph_model_pallas.1} parent=55 // pred_region
        %s2665 = smul.u32 2, %s26
        %p2666 = scmp.lt.s32.totalorder %s25, 1
        %s2667 = scalar_select %p2666, %s25, 1
        %p2668 = scmp.lt.s32.totalorder %s2665, 1
        %s2669 = scalar_select %p2668, %s2665, 1
        %s2670 = smul.addr %s2667, 24
        %s2671 = sadd.s32 %s2669, %s2670
        %s2672 = smul.addr %s2671, 8
        %s2673 = scalar_lea.vmem %s7, %s2672
      $region60: #{graph_model_pallas.1} parent=55 // pred_fallthru
        _
    $region56: #{graph_model_pallas.1} parent=5 // pred_fallthru
      _
  $region6: #{graph_model_pallas.1} parent=0 // loop_footer
    %s18 = sadd.s32 1, %s14
  $region7: #{graph_model_pallas.1} parent=0 // loop_footer_branch
    %13 = sbr.rel target = $region3
  $region8: #{graph_model_pallas.1} parent=0 // loop_exit
    _

</llo_original>
